<compile_context>
chip_gen: v7x
topology: tpu7x:2x2x1
jax: 0.10.0
libtpu: 0.0.40
codegen_flags: <defaults>
</compile_context>

<pallas_src>
import jax
import jax.numpy as jnp
import numpy as np
from jax.experimental import pallas as pl
from jax.experimental.pallas import tpu as pltpu

EPS = 1e-5


def resnet_block_kernel(x_ref, w1_ref, w2_ref, g1_ref, b1_ref, g2_ref, b2_ref,
                        fold_ref, foldt_ref, out_ref, pad_ref):
    # x_ref   : (N, H, W*C)        f32  lane-dense NHWC input (unpadded)
    # w*_ref  : (3, (W+2)*C, W*C)  bf16 banded conv weights (one tap per row dy)
    # g*/b*   : (1, C)             f32  BN gamma / beta
    # fold    : (W*C, C)           f32  lane (w*C+c) -> channel c fold matrix
    # foldt   : (C, W*C)           f32  channel c -> lanes (w*C+c) broadcast
    # out_ref : (N*H, W*C)         f32  lane-dense output
    # pad_ref : (N, H+2, (W+2)*C)  f32  scratch with 1-pixel zero ring
    N, H, WC = x_ref.shape
    C = g1_ref.shape[-1]
    W = WC // C
    Wp = W + 2
    NH = N * H
    inv_cnt = 1.0 / float(N * H * W)

    # Zero the padded scratch once; the border ring stays zero for both convs,
    # only the interior is rewritten.
    pad_ref[...] = jnp.zeros_like(pad_ref)

    fold = fold_ref[...]
    foldt = foldt_ref[...]

    def conv_bn(interior, w_ref, g_ref, b_ref):
        # interior: (N, H, W*C) f32 activation (unpadded, lane-dense).
        pad_ref[:, 1:H + 1, C:C + WC] = interior

        # 3x3 conv as 3 row-tap matmuls against banded weights:
        #   acc[n*H+h, w*C+co] += pad[n, h+dy, :] @ w_banded[dy]
        # bf16 x bf16 MXU with f32 accumulation, K = (W+2)*C, N-lanes = W*C.
        acc = jnp.zeros((NH, WC), dtype=jnp.float32)
        for dy in range(3):
            lhs = pad_ref[:, dy:dy + H, :].reshape(NH, Wp * C)
            acc = acc + jnp.dot(lhs.astype(jnp.bfloat16), w_ref[dy],
                                preferred_element_type=jnp.float32)

        # Single-pass training-mode BatchNorm with folded scale/shift.
        s_row = jnp.sum(acc, axis=0, keepdims=True)            # (1, W*C)
        ss_row = jnp.sum(acc * acc, axis=0, keepdims=True)     # (1, W*C)
        s_c = jnp.dot(s_row, fold, preferred_element_type=jnp.float32)    # (1, C)
        ss_c = jnp.dot(ss_row, fold, preferred_element_type=jnp.float32)  # (1, C)
        mean = s_c * inv_cnt
        var = ss_c * inv_cnt - mean * mean
        scale_c = g_ref[...] * jax.lax.rsqrt(var + EPS)        # (1, C)
        shift_c = b_ref[...] - mean * scale_c                  # (1, C)
        # Broadcast folded scale/shift back onto the 128-lane layout (once).
        scale = jnp.dot(scale_c, foldt, preferred_element_type=jnp.float32)
        shift = jnp.dot(shift_c, foldt, preferred_element_type=jnp.float32)
        return acc * scale + shift                             # lane-dense VPU

    x = x_ref[...]                                             # (N, H, W*C) f32
    y1 = jnp.maximum(conv_bn(x, w1_ref, g1_ref, b1_ref), 0.0)  # (N*H, W*C)
    y2 = conv_bn(y1.reshape(N, H, WC), w2_ref, g2_ref, b2_ref)
    identity = x.reshape(NH, WC)                               # exact f32 residual
    out_ref[...] = jnp.maximum(y2 + identity, 0.0).astype(out_ref.dtype)


def resnet_block(x_nchw, w1, gamma1, beta1, w2, gamma2, beta2):
    """x_nchw: (N, C, H, W) float32; w*: (C, C, 3, 3) PyTorch OIHW; gamma/beta: (C,)."""
    N, C, H, W = x_nchw.shape
    WC = W * C
    Wp = W + 2

    # NCHW -> NHWC, then flatten W and C onto the lane axis (lane-dense).
    # TODO(synk): for multi-block networks keep activations in this lane-dense
    # NHWC layout end-to-end instead of round-tripping NCHW per block.
    x = jnp.transpose(x_nchw, (0, 2, 3, 1)).reshape(N, H, WC)

    # Banded conv weights: (3, (W+2)*C, W*C); row (wp*C+ci), col (w*C+co) holds
    # Wt[dy, wp-w, ci, co]. One matmul per kernel row dy covers all dx, w, ci, co.
    place = np.zeros((3, Wp, W), dtype=np.float32)
    for dx in range(3):
        for w in range(W):
            place[dx, w + dx, w] = 1.0
    place = jnp.asarray(place)

    def banded(w_oihw):
        wt = jnp.transpose(w_oihw, (2, 3, 1, 0))               # (kh, kw, ci, co)
        bw = jnp.einsum('xpw,yxio->ypiwo', place, wt)          # (3, Wp, C, W, C)
        return bw.reshape(3, Wp * C, WC).astype(jnp.bfloat16)

    w1b = banded(w1)
    w2b = banded(w2)

    g1 = gamma1.reshape(1, C).astype(jnp.float32)
    b1 = beta1.reshape(1, C).astype(jnp.float32)
    g2 = gamma2.reshape(1, C).astype(jnp.float32)
    b2 = beta2.reshape(1, C).astype(jnp.float32)

    fold = jnp.asarray(np.tile(np.eye(C, dtype=np.float32), (W, 1)))   # (W*C, C)
    foldt = jnp.transpose(fold)                                        # (C, W*C)

    flops = 2 * (2 * N * H * W * 9 * C * C)          # two 3x3 convs
    bytes_accessed = (x.size * 4 + w1b.size * 2 + w2b.size * 2
                      + (g1.size + b1.size + g2.size + b2.size) * 4
                      + fold.size * 4 + foldt.size * 4 + N * H * WC * 4)
    cost = pl.CostEstimate(flops=flops, transcendentals=2 * C,
                           bytes_accessed=bytes_accessed)

    out2d = pl.pallas_call(
        resnet_block_kernel,
        out_shape=jax.ShapeDtypeStruct((N * H, WC), jnp.float32),
        in_specs=[pl.BlockSpec(memory_space=pltpu.MemorySpace.VMEM)] * 9,
        out_specs=pl.BlockSpec(memory_space=pltpu.MemorySpace.VMEM),
        scratch_shapes=[pltpu.VMEM((N, H + 2, Wp * C), jnp.float32)],
        compiler_params=pltpu.CompilerParams(vmem_limit_bytes=32 * 1024 * 1024),
        cost_estimate=cost,
    )(x, w1b, w2b, g1, b1, g2, b2, fold, foldt)

    out = out2d.reshape(N, H, W, C)
    return jnp.transpose(out, (0, 3, 1, 2))                    # back to NCHW


def resnet_block_reference(x, w1, g1, b1, w2, g2, b2, conv_dtype=jnp.float32):
    """Pure-JAX reference (NCHW), PyTorch training-mode BN. conv_dtype selects
    the conv operand precision (f32 = exact module; bf16 = matched to kernel)."""
    def conv(a, w):
        return jax.lax.conv_general_dilated(
            a.astype(conv_dtype), w.astype(conv_dtype),
            window_strides=(1, 1), padding=((1, 1), (1, 1)),
            dimension_numbers=("NCHW", "OIHW", "NCHW"),
            preferred_element_type=jnp.float32)

    def bn(y, g, b):
        mean = jnp.mean(y, axis=(0, 2, 3), keepdims=True)
        var = jnp.mean((y - mean) ** 2, axis=(0, 2, 3), keepdims=True)
        return ((y - mean) * jax.lax.rsqrt(var + EPS)
                * g.reshape(1, -1, 1, 1) + b.reshape(1, -1, 1, 1))

    out = jnp.maximum(bn(conv(x, w1), g1, b1), 0.0)
    out = bn(conv(out, w2), g2, b2) + x
    return jnp.maximum(out, 0.0)


if __name__ == "__main__":
    N, C, H, W = 2, 8, 16, 16        # W*C = 128 -> fully lane-dense epilogue
    key = jax.random.PRNGKey(0)
    kx, kw1, kw2, kg1, kb1, kg2, kb2 = jax.random.split(key, 7)

    x = jax.random.normal(kx, (N, C, H, W), dtype=jnp.float32)
    w1 = jax.random.normal(kw1, (C, C, 3, 3), dtype=jnp.float32) * 0.1
    w2 = jax.random.normal(kw2, (C, C, 3, 3), dtype=jnp.float32) * 0.1
    gamma1 = jax.random.uniform(kg1, (C,), minval=0.5, maxval=1.5)
    beta1 = jax.random.normal(kb1, (C,)) * 0.1
    gamma2 = jax.random.uniform(kg2, (C,), minval=0.5, maxval=1.5)
    beta2 = jax.random.normal(kb2, (C,)) * 0.1

    fn = jax.jit(resnet_block)
    out = jax.block_until_ready(fn(x, w1, gamma1, beta1, w2, gamma2, beta2))
    assert out.shape == (N, C, H, W)

    # Structural correctness: reference using the same precision choice as the
    # kernel (bf16 conv operands, f32 accumulation) -- tight tolerance.
    ref_matched = resnet_block_reference(x, w1, gamma1, beta1, w2, gamma2, beta2,
                                         conv_dtype=jnp.bfloat16)
    ref_matched = jax.block_until_ready(ref_matched)
    np.testing.assert_allclose(np.asarray(out), np.asarray(ref_matched),
                               rtol=5e-3, atol=5e-3)

    # Sanity vs the exact f32 module semantics (looser tolerance: the only
    # deviation is bf16 rounding of the MXU inputs, standard TPU practice).
    ref_f32 = resnet_block_reference(x, w1, gamma1, beta1, w2, gamma2, beta2,
                                     conv_dtype=jnp.float32)
    ref_f32 = jax.block_until_ready(ref_f32)
    np.testing.assert_allclose(np.asarray(out), np.asarray(ref_f32),
                               rtol=5e-2, atol=5e-2)

    print("KERNEL_OK")
</pallas_src>

<mosaic_0001>
module attributes {stable_mosaic.version = 11 : i64} {
  func.func @resnet_block_kernel(%arg0: memref<2x16x128xf32, #tpu.memory_space<vmem>>, %arg1: memref<3x144x128xbf16, #tpu.memory_space<vmem>>, %arg2: memref<3x144x128xbf16, #tpu.memory_space<vmem>>, %arg3: memref<1x8xf32, #tpu.memory_space<vmem>>, %arg4: memref<1x8xf32, #tpu.memory_space<vmem>>, %arg5: memref<1x8xf32, #tpu.memory_space<vmem>>, %arg6: memref<1x8xf32, #tpu.memory_space<vmem>>, %arg7: memref<128x8xf32, #tpu.memory_space<vmem>>, %arg8: memref<8x128xf32, #tpu.memory_space<vmem>>, %arg9: memref<32x128xf32, #tpu.memory_space<vmem>>, %arg10: memref<2x18x144xf32, #tpu.memory_space<vmem>>) attributes {dimension_semantics = [], scalar_prefetch = 0 : i64, scratch_operands = 1 : i64, tpu.core_type = #tpu.core_type<tc>} {
    %cst = arith.constant 0.000000e+00 : f32
    %0 = vector.broadcast %cst : f32 to vector<2x18x144xf32>
    %c0 = arith.constant 0 : index
    %c0_0 = arith.constant 0 : index
    %c0_1 = arith.constant 0 : index
    %1 = vector.load %arg10[%c0, %c0_0, %c0_1] : memref<2x18x144xf32, #tpu.memory_space<vmem>>, vector<2x18x144xf32>
    tpu.vector_store %arg10[%c0, %c0_0, %c0_1], %0 {strides = array<i32>} : memref<2x18x144xf32, #tpu.memory_space<vmem>>, vector<2x18x144xf32>,
    %c0_2 = arith.constant 0 : index
    %c0_3 = arith.constant 0 : index
    %2 = vector.load %arg7[%c0_2, %c0_3] : memref<128x8xf32, #tpu.memory_space<vmem>>, vector<128x8xf32>
    %c0_4 = arith.constant 0 : index
    %c0_5 = arith.constant 0 : index
    %3 = vector.load %arg8[%c0_4, %c0_5] : memref<8x128xf32, #tpu.memory_space<vmem>>, vector<8x128xf32>
    %c0_6 = arith.constant 0 : index
    %c0_7 = arith.constant 0 : index
    %c0_8 = arith.constant 0 : index
    %4 = vector.load %arg0[%c0_6, %c0_7, %c0_8] : memref<2x16x128xf32, #tpu.memory_space<vmem>>, vector<2x16x128xf32>
    %c0_9 = arith.constant 0 : index
    %c1 = arith.constant 1 : index
    %c8 = arith.constant 8 : index
    %5 = vector.load %arg10[%c0_9, %c1, %c8] : memref<2x18x144xf32, #tpu.memory_space<vmem>>, vector<2x16x128xf32>
    tpu.vector_store %arg10[%c0_9, %c1, %c8], %4 {strides = array<i32>} : memref<2x18x144xf32, #tpu.memory_space<vmem>>, vector<2x16x128xf32>,
    %cst_10 = arith.constant 0.000000e+00 : f32
    %6 = vector.broadcast %cst_10 : f32 to vector<32x128xf32>
    %c0_11 = arith.constant 0 : index
    %c0_12 = arith.constant 0 : index
    %c0_13 = arith.constant 0 : index
    %7 = vector.load %arg10[%c0_11, %c0_12, %c0_13] : memref<2x18x144xf32, #tpu.memory_space<vmem>>, vector<2x16x144xf32>
    %8 = vector.shape_cast %7 : vector<2x16x144xf32> to vector<32x144xf32>
    %9 = arith.truncf %8 : vector<32x144xf32> to vector<32x144xbf16>
    %c0_14 = arith.constant 0 : index
    %c0_15 = arith.constant 0 : index
    %c0_16 = arith.constant 0 : index
    %10 = vector.load %arg1[%c0_14, %c0_15, %c0_16] : memref<3x144x128xbf16, #tpu.memory_space<vmem>>, vector<1x144x128xbf16>
    %11 = vector.shape_cast %10 : vector<1x144x128xbf16> to vector<144x128xbf16>
    %cst_17 = arith.constant dense<0.000000e+00> : vector<32x128xf32>
    %12 = tpu.matmul %9, %11, %cst_17 {dimension_numbers = #tpu.dot_dimension_numbers<[1], [0], [0], [1], [0, 0, 1, 1], [], []>} : vector<32x144xbf16>, vector<144x128xbf16>, vector<32x128xf32> -> vector<32x128xf32>
    %13 = arith.addf %6, %12 : vector<32x128xf32>
    %c0_18 = arith.constant 0 : index
    %c1_19 = arith.constant 1 : index
    %c0_20 = arith.constant 0 : index
    %14 = vector.load %arg10[%c0_18, %c1_19, %c0_20] : memref<2x18x144xf32, #tpu.memory_space<vmem>>, vector<2x16x144xf32>
    %15 = vector.shape_cast %14 : vector<2x16x144xf32> to vector<32x144xf32>
    %16 = arith.truncf %15 : vector<32x144xf32> to vector<32x144xbf16>
    %c1_21 = arith.constant 1 : index
    %c0_22 = arith.constant 0 : index
    %c0_23 = arith.constant 0 : index
    %17 = vector.load %arg1[%c1_21, %c0_22, %c0_23] : memref<3x144x128xbf16, #tpu.memory_space<vmem>>, vector<1x144x128xbf16>
    %18 = vector.shape_cast %17 : vector<1x144x128xbf16> to vector<144x128xbf16>
    %cst_24 = arith.constant dense<0.000000e+00> : vector<32x128xf32>
    %19 = tpu.matmul %16, %18, %cst_24 {dimension_numbers = #tpu.dot_dimension_numbers<[1], [0], [0], [1], [0, 0, 1, 1], [], []>} : vector<32x144xbf16>, vector<144x128xbf16>, vector<32x128xf32> -> vector<32x128xf32>
    %20 = arith.addf %13, %19 : vector<32x128xf32>
    %c0_25 = arith.constant 0 : index
    %c2 = arith.constant 2 : index
    %c0_26 = arith.constant 0 : index
    %21 = vector.load %arg10[%c0_25, %c2, %c0_26] : memref<2x18x144xf32, #tpu.memory_space<vmem>>, vector<2x16x144xf32>
    %22 = vector.shape_cast %21 : vector<2x16x144xf32> to vector<32x144xf32>
    %23 = arith.truncf %22 : vector<32x144xf32> to vector<32x144xbf16>
    %c2_27 = arith.constant 2 : index
    %c0_28 = arith.constant 0 : index
    %c0_29 = arith.constant 0 : index
    %24 = vector.load %arg1[%c2_27, %c0_28, %c0_29] : memref<3x144x128xbf16, #tpu.memory_space<vmem>>, vector<1x144x128xbf16>
    %25 = vector.shape_cast %24 : vector<1x144x128xbf16> to vector<144x128xbf16>
    %cst_30 = arith.constant dense<0.000000e+00> : vector<32x128xf32>
    %26 = tpu.matmul %23, %25, %cst_30 {dimension_numbers = #tpu.dot_dimension_numbers<[1], [0], [0], [1], [0, 0, 1, 1], [], []>} : vector<32x144xbf16>, vector<144x128xbf16>, vector<32x128xf32> -> vector<32x128xf32>
    %27 = arith.addf %20, %26 : vector<32x128xf32>
    %cst_31 = arith.constant dense<0.000000e+00> : vector<128xf32>
    %28 = vector.multi_reduction <add>, %27, %cst_31 [0] : vector<32x128xf32> to vector<128xf32>
    %29 = vector.shape_cast %28 : vector<128xf32> to vector<1x128xf32>
    %30 = arith.mulf %27, %27 : vector<32x128xf32>
    %cst_32 = arith.constant dense<0.000000e+00> : vector<128xf32>
    %31 = vector.multi_reduction <add>, %30, %cst_32 [0] : vector<32x128xf32> to vector<128xf32>
    %32 = vector.shape_cast %31 : vector<128xf32> to vector<1x128xf32>
    %cst_33 = arith.constant dense<0.000000e+00> : vector<1x8xf32>
    %33 = tpu.matmul %29, %2, %cst_33 {dimension_numbers = #tpu.dot_dimension_numbers<[1], [0], [0], [1], [0, 0, 1, 1], [], []>} : vector<1x128xf32>, vector<128x8xf32>, vector<1x8xf32> -> vector<1x8xf32>
    %cst_34 = arith.constant dense<0.000000e+00> : vector<1x8xf32>
    %34 = tpu.matmul %32, %2, %cst_34 {dimension_numbers = #tpu.dot_dimension_numbers<[1], [0], [0], [1], [0, 0, 1, 1], [], []>} : vector<1x128xf32>, vector<128x8xf32>, vector<1x8xf32> -> vector<1x8xf32>
    %cst_35 = arith.constant 0.001953125 : f32
    %35 = vector.broadcast %cst_35 : f32 to vector<1x8xf32>
    %36 = arith.mulf %33, %35 : vector<1x8xf32>
    %cst_36 = arith.constant 0.001953125 : f32
    %37 = vector.broadcast %cst_36 : f32 to vector<1x8xf32>
    %38 = arith.mulf %34, %37 : vector<1x8xf32>
    %39 = arith.mulf %36, %36 : vector<1x8xf32>
    %40 = arith.subf %38, %39 : vector<1x8xf32>
    %c0_37 = arith.constant 0 : index
    %c0_38 = arith.constant 0 : index
    %41 = vector.load %arg3[%c0_37, %c0_38] : memref<1x8xf32, #tpu.memory_space<vmem>>, vector<1x8xf32>
    %cst_39 = arith.constant 9.99999974E-6 : f32
    %42 = vector.broadcast %cst_39 : f32 to vector<1x8xf32>
    %43 = arith.addf %40, %42 : vector<1x8xf32>
    %44 = math.rsqrt %43 : vector<1x8xf32>
    %45 = arith.mulf %41, %44 : vector<1x8xf32>
    %c0_40 = arith.constant 0 : index
    %c0_41 = arith.constant 0 : index
    %46 = vector.load %arg4[%c0_40, %c0_41] : memref<1x8xf32, #tpu.memory_space<vmem>>, vector<1x8xf32>
    %47 = arith.mulf %36, %45 : vector<1x8xf32>
    %48 = arith.subf %46, %47 : vector<1x8xf32>
    %cst_42 = arith.constant dense<0.000000e+00> : vector<1x128xf32>
    %49 = tpu.matmul %45, %3, %cst_42 {dimension_numbers = #tpu.dot_dimension_numbers<[1], [0], [0], [1], [0, 0, 1, 1], [], []>} : vector<1x8xf32>, vector<8x128xf32>, vector<1x128xf32> -> vector<1x128xf32>
    %cst_43 = arith.constant dense<0.000000e+00> : vector<1x128xf32>
    %50 = tpu.matmul %48, %3, %cst_43 {dimension_numbers = #tpu.dot_dimension_numbers<[1], [0], [0], [1], [0, 0, 1, 1], [], []>} : vector<1x8xf32>, vector<8x128xf32>, vector<1x128xf32> -> vector<1x128xf32>
    %51 = vector.broadcast %49 : vector<1x128xf32> to vector<32x128xf32>
    %52 = arith.mulf %27, %51 : vector<32x128xf32>
    %53 = vector.broadcast %50 : vector<1x128xf32> to vector<32x128xf32>
    %54 = arith.addf %52, %53 : vector<32x128xf32>
    %cst_44 = arith.constant 0.000000e+00 : f32
    %55 = vector.broadcast %cst_44 : f32 to vector<32x128xf32>
    %56 = arith.maximumf %54, %55 : vector<32x128xf32>
    %57 = vector.shape_cast %56 : vector<32x128xf32> to vector<2x16x128xf32>
    %c0_45 = arith.constant 0 : index
    %c1_46 = arith.constant 1 : index
    %c8_47 = arith.constant 8 : index
    %58 = vector.load %arg10[%c0_45, %c1_46, %c8_47] : memref<2x18x144xf32, #tpu.memory_space<vmem>>, vector<2x16x128xf32>
    tpu.vector_store %arg10[%c0_45, %c1_46, %c8_47], %57 {strides = array<i32>} : memref<2x18x144xf32, #tpu.memory_space<vmem>>, vector<2x16x128xf32>,
    %cst_48 = arith.constant 0.000000e+00 : f32
    %59 = vector.broadcast %cst_48 : f32 to vector<32x128xf32>
    %c0_49 = arith.constant 0 : index
    %c0_50 = arith.constant 0 : index
    %c0_51 = arith.constant 0 : index
    %60 = vector.load %arg10[%c0_49, %c0_50, %c0_51] : memref<2x18x144xf32, #tpu.memory_space<vmem>>, vector<2x16x144xf32>
    %61 = vector.shape_cast %60 : vector<2x16x144xf32> to vector<32x144xf32>
    %62 = arith.truncf %61 : vector<32x144xf32> to vector<32x144xbf16>
    %c0_52 = arith.constant 0 : index
    %c0_53 = arith.constant 0 : index
    %c0_54 = arith.constant 0 : index
    %63 = vector.load %arg2[%c0_52, %c0_53, %c0_54] : memref<3x144x128xbf16, #tpu.memory_space<vmem>>, vector<1x144x128xbf16>
    %64 = vector.shape_cast %63 : vector<1x144x128xbf16> to vector<144x128xbf16>
    %cst_55 = arith.constant dense<0.000000e+00> : vector<32x128xf32>
    %65 = tpu.matmul %62, %64, %cst_55 {dimension_numbers = #tpu.dot_dimension_numbers<[1], [0], [0], [1], [0, 0, 1, 1], [], []>} : vector<32x144xbf16>, vector<144x128xbf16>, vector<32x128xf32> -> vector<32x128xf32>
    %66 = arith.addf %59, %65 : vector<32x128xf32>
    %c0_56 = arith.constant 0 : index
    %c1_57 = arith.constant 1 : index
    %c0_58 = arith.constant 0 : index
    %67 = vector.load %arg10[%c0_56, %c1_57, %c0_58] : memref<2x18x144xf32, #tpu.memory_space<vmem>>, vector<2x16x144xf32>
    %68 = vector.shape_cast %67 : vector<2x16x144xf32> to vector<32x144xf32>
    %69 = arith.truncf %68 : vector<32x144xf32> to vector<32x144xbf16>
    %c1_59 = arith.constant 1 : index
    %c0_60 = arith.constant 0 : index
    %c0_61 = arith.constant 0 : index
    %70 = vector.load %arg2[%c1_59, %c0_60, %c0_61] : memref<3x144x128xbf16, #tpu.memory_space<vmem>>, vector<1x144x128xbf16>
    %71 = vector.shape_cast %70 : vector<1x144x128xbf16> to vector<144x128xbf16>
    %cst_62 = arith.constant dense<0.000000e+00> : vector<32x128xf32>
    %72 = tpu.matmul %69, %71, %cst_62 {dimension_numbers = #tpu.dot_dimension_numbers<[1], [0], [0], [1], [0, 0, 1, 1], [], []>} : vector<32x144xbf16>, vector<144x128xbf16>, vector<32x128xf32> -> vector<32x128xf32>
    %73 = arith.addf %66, %72 : vector<32x128xf32>
    %c0_63 = arith.constant 0 : index
    %c2_64 = arith.constant 2 : index
    %c0_65 = arith.constant 0 : index
    %74 = vector.load %arg10[%c0_63, %c2_64, %c0_65] : memref<2x18x144xf32, #tpu.memory_space<vmem>>, vector<2x16x144xf32>
    %75 = vector.shape_cast %74 : vector<2x16x144xf32> to vector<32x144xf32>
    %76 = arith.truncf %75 : vector<32x144xf32> to vector<32x144xbf16>
    %c2_66 = arith.constant 2 : index
    %c0_67 = arith.constant 0 : index
    %c0_68 = arith.constant 0 : index
    %77 = vector.load %arg2[%c2_66, %c0_67, %c0_68] : memref<3x144x128xbf16, #tpu.memory_space<vmem>>, vector<1x144x128xbf16>
    %78 = vector.shape_cast %77 : vector<1x144x128xbf16> to vector<144x128xbf16>
    %cst_69 = arith.constant dense<0.000000e+00> : vector<32x128xf32>
    %79 = tpu.matmul %76, %78, %cst_69 {dimension_numbers = #tpu.dot_dimension_numbers<[1], [0], [0], [1], [0, 0, 1, 1], [], []>} : vector<32x144xbf16>, vector<144x128xbf16>, vector<32x128xf32> -> vector<32x128xf32>
    %80 = arith.addf %73, %79 : vector<32x128xf32>
    %cst_70 = arith.constant dense<0.000000e+00> : vector<128xf32>
    %81 = vector.multi_reduction <add>, %80, %cst_70 [0] : vector<32x128xf32> to vector<128xf32>
    %82 = vector.shape_cast %81 : vector<128xf32> to vector<1x128xf32>
    %83 = arith.mulf %80, %80 : vector<32x128xf32>
    %cst_71 = arith.constant dense<0.000000e+00> : vector<128xf32>
    %84 = vector.multi_reduction <add>, %83, %cst_71 [0] : vector<32x128xf32> to vector<128xf32>
    %85 = vector.shape_cast %84 : vector<128xf32> to vector<1x128xf32>
    %cst_72 = arith.constant dense<0.000000e+00> : vector<1x8xf32>
    %86 = tpu.matmul %82, %2, %cst_72 {dimension_numbers = #tpu.dot_dimension_numbers<[1], [0], [0], [1], [0, 0, 1, 1], [], []>} : vector<1x128xf32>, vector<128x8xf32>, vector<1x8xf32> -> vector<1x8xf32>
    %cst_73 = arith.constant dense<0.000000e+00> : vector<1x8xf32>
    %87 = tpu.matmul %85, %2, %cst_73 {dimension_numbers = #tpu.dot_dimension_numbers<[1], [0], [0], [1], [0, 0, 1, 1], [], []>} : vector<1x128xf32>, vector<128x8xf32>, vector<1x8xf32> -> vector<1x8xf32>
    %cst_74 = arith.constant 0.001953125 : f32
    %88 = vector.broadcast %cst_74 : f32 to vector<1x8xf32>
    %89 = arith.mulf %86, %88 : vector<1x8xf32>
    %cst_75 = arith.constant 0.001953125 : f32
    %90 = vector.broadcast %cst_75 : f32 to vector<1x8xf32>
    %91 = arith.mulf %87, %90 : vector<1x8xf32>
    %92 = arith.mulf %89, %89 : vector<1x8xf32>
    %93 = arith.subf %91, %92 : vector<1x8xf32>
    %c0_76 = arith.constant 0 : index
    %c0_77 = arith.constant 0 : index
    %94 = vector.load %arg5[%c0_76, %c0_77] : memref<1x8xf32, #tpu.memory_space<vmem>>, vector<1x8xf32>
    %cst_78 = arith.constant 9.99999974E-6 : f32
    %95 = vector.broadcast %cst_78 : f32 to vector<1x8xf32>
    %96 = arith.addf %93, %95 : vector<1x8xf32>
    %97 = math.rsqrt %96 : vector<1x8xf32>
    %98 = arith.mulf %94, %97 : vector<1x8xf32>
    %c0_79 = arith.constant 0 : index
    %c0_80 = arith.constant 0 : index
    %99 = vector.load %arg6[%c0_79, %c0_80] : memref<1x8xf32, #tpu.memory_space<vmem>>, vector<1x8xf32>
    %100 = arith.mulf %89, %98 : vector<1x8xf32>
    %101 = arith.subf %99, %100 : vector<1x8xf32>
    %cst_81 = arith.constant dense<0.000000e+00> : vector<1x128xf32>
    %102 = tpu.matmul %98, %3, %cst_81 {dimension_numbers = #tpu.dot_dimension_numbers<[1], [0], [0], [1], [0, 0, 1, 1], [], []>} : vector<1x8xf32>, vector<8x128xf32>, vector<1x128xf32> -> vector<1x128xf32>
    %cst_82 = arith.constant dense<0.000000e+00> : vector<1x128xf32>
    %103 = tpu.matmul %101, %3, %cst_82 {dimension_numbers = #tpu.dot_dimension_numbers<[1], [0], [0], [1], [0, 0, 1, 1], [], []>} : vector<1x8xf32>, vector<8x128xf32>, vector<1x128xf32> -> vector<1x128xf32>
    %104 = vector.broadcast %102 : vector<1x128xf32> to vector<32x128xf32>
    %105 = arith.mulf %80, %104 : vector<32x128xf32>
    %106 = vector.broadcast %103 : vector<1x128xf32> to vector<32x128xf32>
    %107 = arith.addf %105, %106 : vector<32x128xf32>
    %108 = vector.shape_cast %4 : vector<2x16x128xf32> to vector<32x128xf32>
    %109 = arith.addf %107, %108 : vector<32x128xf32>
    %cst_83 = arith.constant 0.000000e+00 : f32
    %110 = vector.broadcast %cst_83 : f32 to vector<32x128xf32>
    %111 = arith.maximumf %109, %110 : vector<32x128xf32>
    %c0_84 = arith.constant 0 : index
    %c0_85 = arith.constant 0 : index
    %112 = vector.load %arg9[%c0_84, %c0_85] : memref<32x128xf32, #tpu.memory_space<vmem>>, vector<32x128xf32>
    tpu.vector_store %arg9[%c0_84, %c0_85], %111 {strides = array<i32>} : memref<32x128xf32, #tpu.memory_space<vmem>>, vector<32x128xf32>,
    return
  }
}

</mosaic_0001>

<llo_original>
// kernel: resnet_block.1
$region0: #{resnet_block.1}
  #allocation0 [shape = 'u32[]', space=smem, size = 0x4, offset = 0x4, fixed_abs, tag = 'smem constant byte address 0x4 - core index']
  #allocation1 [shape = 'u32[144,128]{1,0:T(1,128)}', space=vmem, size = 0x12000, scoped, tag = 'internal scratch']
  #allocation2 [shape = 'f32[2,18,144]{2,1,0:T(8,128)}', space=vmem, size = 0xc000, scoped, tag = 'scratch operand']
  %s0 = inlined_call_operand.vmem [shape: f32[2,16,128], index: 0, kind: input, shape index: {}]
  %s1 = inlined_call_operand.vmem [shape: bf16[3,144,128], index: 1, kind: input, shape index: {}]
  %s2 = inlined_call_operand.vmem [shape: bf16[3,144,128], index: 2, kind: input, shape index: {}]
  %s3 = inlined_call_operand.vmem [shape: f32[1,8], index: 3, kind: input, shape index: {}]
  %s4 = inlined_call_operand.vmem [shape: f32[1,8], index: 4, kind: input, shape index: {}]
  %s5 = inlined_call_operand.vmem [shape: f32[1,8], index: 5, kind: input, shape index: {}]
  %s6 = inlined_call_operand.vmem [shape: f32[1,8], index: 6, kind: input, shape index: {}]
  %s7 = inlined_call_operand.vmem [shape: f32[128,8], index: 7, kind: input, shape index: {}]
  %s8 = inlined_call_operand.vmem [shape: f32[8,128], index: 8, kind: input, shape index: {}]
  %s9 = inlined_call_operand.vmem [shape: f32[32,128], index: 9, kind: output, shape index: {}]
  %s10 = sld [smem:[#allocation0]]
  $region46: #{resnet_block.1} parent=0
    _
  %s12 = ssub.s32 1, %s10
  %s13 = scalar_select 0, %s12, %s10
  // Predicated region
  $region2: #{resnet_block.1} parent=0 // pred_check
    _
  $region3: #{resnet_block.1} parent=0 // pred_check_branch
    %15 = sbr.rel (0) target = $region5
  $region4: #{resnet_block.1} parent=0 // pred_region
    _
  $region5: #{resnet_block.1} parent=0 // pred_fallthru
    _
  // Predicated region
  $region6: #{resnet_block.1} parent=0 // pred_check
    _
  $region7: #{resnet_block.1} parent=0 // pred_check_branch
    %17 = sbr.rel (0) target = $region9
  $region8: #{resnet_block.1} parent=0 // pred_region
    _
  $region9: #{resnet_block.1} parent=0 // pred_fallthru
    _
  // Predicated region
  $region10: #{resnet_block.1} parent=0 // pred_check
    _
  $region11: #{resnet_block.1} parent=0 // pred_check_branch
    %19 = sbr.rel (0) target = $region13
  $region12: #{resnet_block.1} parent=0 // pred_region
    _
  $region13: #{resnet_block.1} parent=0 // pred_fallthru
    _
  // Predicated region
  $region14: #{resnet_block.1} parent=0 // pred_check
    _
  $region15: #{resnet_block.1} parent=0 // pred_check_branch
    %21 = sbr.rel (0) target = $region17
  $region16: #{resnet_block.1} parent=0 // pred_region
    _
  $region17: #{resnet_block.1} parent=0 // pred_fallthru
    _
  // Predicated region
  $region18: #{resnet_block.1} parent=0 // pred_check
    _
  $region19: #{resnet_block.1} parent=0 // pred_check_branch
    %23 = sbr.rel (0) target = $region21
  $region20: #{resnet_block.1} parent=0 // pred_region
    _
  $region21: #{resnet_block.1} parent=0 // pred_fallthru
    _
  // Predicated region
  $region22: #{resnet_block.1} parent=0 // pred_check
    _
  $region23: #{resnet_block.1} parent=0 // pred_check_branch
    %25 = sbr.rel (0) target = $region25
  $region24: #{resnet_block.1} parent=0 // pred_region
    _
  $region25: #{resnet_block.1} parent=0 // pred_fallthru
    _
  // Predicated region
  $region26: #{resnet_block.1} parent=0 // pred_check
    _
  $region27: #{resnet_block.1} parent=0 // pred_check_branch
    %27 = sbr.rel (0) target = $region29
  $region28: #{resnet_block.1} parent=0 // pred_region
    _
  $region29: #{resnet_block.1} parent=0 // pred_fallthru
    _
  // Predicated region
  $region30: #{resnet_block.1} parent=0 // pred_check
    _
  $region31: #{resnet_block.1} parent=0 // pred_check_branch
    %29 = sbr.rel (0) target = $region33
  $region32: #{resnet_block.1} parent=0 // pred_region
    _
  $region33: #{resnet_block.1} parent=0 // pred_fallthru
    _
  // Predicated region
  $region34: #{resnet_block.1} parent=0 // pred_check
    _
  $region35: #{resnet_block.1} parent=0 // pred_check_branch
    %31 = sbr.rel (0) target = $region37
  $region36: #{resnet_block.1} parent=0 // pred_region
    _
  $region37: #{resnet_block.1} parent=0 // pred_fallthru
    _
  %33 = vst [vmem:[#allocation2] sm:$0xff] 0.0
  %vm34 = vcmask 130048
  %35 = vst.msk [vmem:[#allocation2 + $0x8] sm:$0xff] %vm34, 0.0
  %36 = vst [vmem:[#allocation2 + $0x10] sm:$0xff] 0.0
  %37 = vst.msk [vmem:[#allocation2 + $0x18] sm:$0xff] %vm34, 0.0
  %38 = vst [vmem:[#allocation2 + $0x20] sm:$0x3] 0.0
  %vm39 = vcmask 123904
  %40 = vst.msk [vmem:[#allocation2 + $0x28] sm:$0x3] %vm39, 0.0
  %41 = vst [vmem:[#allocation2 + $0x30] sm:$0xff] 0.0
  %42 = vst.msk [vmem:[#allocation2 + $0x38] sm:$0xff] %vm34, 0.0
  %43 = vst [vmem:[#allocation2 + $0x40] sm:$0xff] 0.0
  %44 = vst.msk [vmem:[#allocation2 + $0x48] sm:$0xff] %vm34, 0.0
  %45 = vst [vmem:[#allocation2 + $0x50] sm:$0x3] 0.0
  %46 = vst.msk [vmem:[#allocation2 + $0x58] sm:$0x3] %vm39, 0.0
  %v47 = vld [vmem:[%s7] sm:$0xff]
  %v48 = vld [vmem:[%s7 + $0x8] sm:$0xff]
  %v49 = vld [vmem:[%s7 + $0x10] sm:$0xff]
  %v50 = vld [vmem:[%s7 + $0x18] sm:$0xff]
  %v51 = vld [vmem:[%s7 + $0x20] sm:$0xff]
  %v52 = vld [vmem:[%s7 + $0x28] sm:$0xff]
  %v53 = vld [vmem:[%s7 + $0x30] sm:$0xff]
  %v54 = vld [vmem:[%s7 + $0x38] sm:$0xff]
  %v55 = vld [vmem:[%s7 + $0x40] sm:$0xff]
  %v56 = vld [vmem:[%s7 + $0x48] sm:$0xff]
  %v57 = vld [vmem:[%s7 + $0x50] sm:$0xff]
  %v58 = vld [vmem:[%s7 + $0x58] sm:$0xff]
  %v59 = vld [vmem:[%s7 + $0x60] sm:$0xff]
  %v60 = vld [vmem:[%s7 + $0x68] sm:$0xff]
  %v61 = vld [vmem:[%s7 + $0x70] sm:$0xff]
  %v62 = vld [vmem:[%s7 + $0x78] sm:$0xff]
  %v63 = vld [vmem:[%s8] sm:$0xff]
  %v64 = vld [vmem:[%s0] sm:$0xff]
  %v65 = vld [vmem:[%s0 + $0x8] sm:$0xff]
  %v66 = vld [vmem:[%s0 + $0x10] sm:$0xff]
  %v67 = vld [vmem:[%s0 + $0x18] sm:$0xff]
  %vm72 = vcmask 1040384
  %v73 = vrot.slane %v64, 7
  %v74 = vrot.slane %v65, 7
  %v75 = vsel %vm72, %v73, %v74
  %v76 = vrot.slane %v66, 7
  %v77 = vrot.slane %v67, 7
  %v78 = vsel %vm72, %v76, %v77
  %79 = vrot.lane.b32.xlu0 %v73, 8
  %v80 = vpop.permute.xlu0 %79
  %81 = vrot.lane.b32.xlu0 %v75, 8
  %v82 = vpop.permute.xlu0 %81
  %83 = vrot.lane.b32.xlu0 %v74, 8
  %v84 = vpop.permute.xlu0 %83
  %85 = vrot.lane.b32.xlu0 %v76, 8
  %v86 = vpop.permute.xlu0 %85
  %87 = vrot.lane.b32.xlu0 %v78, 8
  %v88 = vpop.permute.xlu0 %87
  %89 = vrot.lane.b32.xlu0 %v77, 8
  %v90 = vpop.permute.xlu0 %89
  %vm97 = vcmask 1047617
  %98 = vst.msk [vmem:[#allocation2] sm:$0xfe] %vm97, %v80
  %vm99 = vcmask 64513
  %100 = vst.msk [vmem:[#allocation2 + $0x8] sm:$0xfe] %vm99, %v80
  %vm101 = vcmask 1047616
  %102 = vst.msk [vmem:[#allocation2 + $0x10] sm:$0xff] %vm101, %v82
  %vm103 = vcmask 64512
  %104 = vst.msk [vmem:[#allocation2 + $0x18] sm:$0xff] %vm103, %v82
  %vm105 = vcmask 1040448
  %106 = vst.msk [vmem:[#allocation2 + $0x20] sm:$0x1] %vm105, %v84
  %vm107 = vcmask 57344
  %108 = vst.msk [vmem:[#allocation2 + $0x28] sm:$0x1] %vm107, %v84
  %109 = vst.msk [vmem:[#allocation2 + $0x30] sm:$0xfe] %vm97, %v86
  %110 = vst.msk [vmem:[#allocation2 + $0x38] sm:$0xfe] %vm99, %v86
  %111 = vst.msk [vmem:[#allocation2 + $0x40] sm:$0xff] %vm101, %v88
  %112 = vst.msk [vmem:[#allocation2 + $0x48] sm:$0xff] %vm103, %v88
  %113 = vst.msk [vmem:[#allocation2 + $0x50] sm:$0x1] %vm105, %v90
  %114 = vst.msk [vmem:[#allocation2 + $0x58] sm:$0x1] %vm107, %v90
  %v115 = vld [vmem:[#allocation2] sm:$0xff]
  %v116 = vld [vmem:[#allocation2 + $0x8] sm:$0xff]
  %v117 = vld [vmem:[#allocation2 + $0x10] sm:$0xff]
  %v118 = vld [vmem:[#allocation2 + $0x18] sm:$0xff]
  %v119 = vld [vmem:[#allocation2 + $0x30] sm:$0xff]
  %v120 = vld [vmem:[#allocation2 + $0x38] sm:$0xff]
  %v121 = vld [vmem:[#allocation2 + $0x40] sm:$0xff]
  %v122 = vld [vmem:[#allocation2 + $0x48] sm:$0xff]
  %v123 = vpack.c.bf16 %v117, %v115
  %v124 = vpack.c.bf16 %v118, %v116
  %v125 = vpack.c.bf16 %v121, %v119
  %v126 = vpack.c.bf16 %v122, %v120
  %v127 = vld [vmem:[%s1] sm:$0xf]
  %v128 = vld [vmem:[%s1 + $0x4] sm:$0xf]
  %v129 = vld [vmem:[%s1 + $0x8] sm:$0xf]
  %v130 = vld [vmem:[%s1 + $0xc] sm:$0xf]
  %v131 = vld [vmem:[%s1 + $0x10] sm:$0xf]
  %v132 = vld [vmem:[%s1 + $0x14] sm:$0xf]
  %v133 = vld [vmem:[%s1 + $0x18] sm:$0xf]
  %v134 = vld [vmem:[%s1 + $0x1c] sm:$0xf]
  %v135 = vld [vmem:[%s1 + $0x20] sm:$0xf]
  %v136 = vld [vmem:[%s1 + $0x24] sm:$0xf]
  %v137 = vld [vmem:[%s1 + $0x28] sm:$0xf]
  %v138 = vld [vmem:[%s1 + $0x2c] sm:$0xf]
  %v139 = vld [vmem:[%s1 + $0x30] sm:$0xf]
  %v140 = vld [vmem:[%s1 + $0x34] sm:$0xf]
  %v141 = vld [vmem:[%s1 + $0x38] sm:$0xf]
  %v142 = vld [vmem:[%s1 + $0x3c] sm:$0xf]
  %v143 = vld [vmem:[%s1 + $0x40] sm:$0xf]
  %v144 = vld [vmem:[%s1 + $0x44] sm:$0xf]
  %v145 = vld [vmem:[#allocation2] sm:$0xfe]
  %v146 = vld [vmem:[#allocation2 + $0x8] sm:$0xfe]
  %v147 = vld [vmem:[#allocation2 + $0x20] sm:$0x1]
  %v148 = vld [vmem:[#allocation2 + $0x28] sm:$0x1]
  %v149 = vld [vmem:[#allocation2 + $0x30] sm:$0xfe]
  %v150 = vld [vmem:[#allocation2 + $0x38] sm:$0xfe]
  %v151 = vld [vmem:[#allocation2 + $0x50] sm:$0x1]
  %v152 = vld [vmem:[#allocation2 + $0x58] sm:$0x1]
  %vm165 = vcmask 1046528
  %v166 = vrot.slane %v145, 1
  %v167 = vrot.slane %v117, 1
  %v168 = vsel %vm165, %v166, %v167
  %v169 = vrot.slane %v146, 1
  %v170 = vrot.slane %v118, 1
  %v171 = vsel %vm165, %v169, %v170
  %v172 = vrot.slane %v147, 1
  %v173 = vsel %vm165, %v167, %v172
  %v174 = vrot.slane %v148, 1
  %v175 = vsel %vm165, %v170, %v174
  %v176 = vrot.slane %v149, 1
  %v177 = vrot.slane %v121, 1
  %v178 = vsel %vm165, %v176, %v177
  %v179 = vrot.slane %v150, 1
  %v180 = vrot.slane %v122, 1
  %v181 = vsel %vm165, %v179, %v180
  %v182 = vrot.slane %v151, 1
  %v183 = vsel %vm165, %v177, %v182
  %v184 = vrot.slane %v152, 1
  %v185 = vsel %vm165, %v180, %v184
  %v194 = vpack.c.bf16 %v173, %v168
  %v195 = vpack.c.bf16 %v175, %v171
  %v196 = vpack.c.bf16 %v183, %v178
  %v197 = vpack.c.bf16 %v185, %v181
  %s198 = scalar_lea.vmem %s1, 72
  %v199 = vld [vmem:[%s198] sm:$0xf]
  %v200 = vld [vmem:[%s198 + $0x4] sm:$0xf]
  %v201 = vld [vmem:[%s198 + $0x8] sm:$0xf]
  %v202 = vld [vmem:[%s198 + $0xc] sm:$0xf]
  %v203 = vld [vmem:[%s198 + $0x10] sm:$0xf]
  %v204 = vld [vmem:[%s198 + $0x14] sm:$0xf]
  %v205 = vld [vmem:[%s198 + $0x18] sm:$0xf]
  %v206 = vld [vmem:[%s198 + $0x1c] sm:$0xf]
  %v207 = vld [vmem:[%s198 + $0x20] sm:$0xf]
  %v208 = vld [vmem:[%s198 + $0x24] sm:$0xf]
  %v209 = vld [vmem:[%s198 + $0x28] sm:$0xf]
  %v210 = vld [vmem:[%s198 + $0x2c] sm:$0xf]
  %v211 = vld [vmem:[%s198 + $0x30] sm:$0xf]
  %v212 = vld [vmem:[%s198 + $0x34] sm:$0xf]
  %v213 = vld [vmem:[%s198 + $0x38] sm:$0xf]
  %v214 = vld [vmem:[%s198 + $0x3c] sm:$0xf]
  %v215 = vld [vmem:[%s198 + $0x40] sm:$0xf]
  %v216 = vld [vmem:[%s198 + $0x44] sm:$0xf]
  %v235 = vunpack.c.l.b16 %v199
  %v236 = vunpack.c.l.b16 %v200
  %v237 = vunpack.c.l.b16 %v201
  %v238 = vunpack.c.l.b16 %v202
  %v239 = vunpack.c.l.b16 %v203
  %v240 = vunpack.c.l.b16 %v204
  %v241 = vunpack.c.l.b16 %v205
  %v242 = vunpack.c.l.b16 %v206
  %v243 = vunpack.c.l.b16 %v207
  %v244 = vunpack.c.l.b16 %v208
  %v245 = vunpack.c.l.b16 %v209
  %v246 = vunpack.c.l.b16 %v210
  %v247 = vunpack.c.l.b16 %v211
  %v248 = vunpack.c.l.b16 %v212
  %v249 = vunpack.c.l.b16 %v213
  %v250 = vunpack.c.l.b16 %v214
  %v251 = vunpack.c.l.b16 %v215
  %v252 = vunpack.c.l.b16 %v216
  %v253 = vpack.c.b16 %v236, %v235
  %v254 = vpack.c.b16 %v238, %v237
  %v255 = vpack.c.b16 %v240, %v239
  %v256 = vpack.c.b16 %v242, %v241
  %v257 = vpack.c.b16 %v244, %v243
  %v258 = vpack.c.b16 %v246, %v245
  %v259 = vpack.c.b16 %v248, %v247
  %v260 = vpack.c.b16 %v250, %v249
  %v261 = vpack.c.b16 %v252, %v251
  %v272 = vsel %vm34, %v195, 0
  %v275 = vsel %vm34, %v197, 0
  %277 = vmatprep.subr.bf16.mxu0 0
  %278 = vmatpush1.bf16.msra.mxu0 %v253
  %279 = vmatprep.subr.bf16.mxu0 0
  %280 = vmatpush1.bf16.msra.mxu0 %v254
  %281 = vmatprep.subr.bf16.mxu0 0
  %282 = vmatpush1.bf16.msra.mxu0 %v255
  %283 = vmatprep.subr.bf16.mxu0 0
  %284 = vmatpush1.bf16.msra.mxu0 %v256
  %285 = vmatprep.subr.bf16.mxu0 0
  %286 = vmatpush1.bf16.msra.mxu0 %v257
  %287 = vmatprep.subr.bf16.mxu0 0
  %288 = vmatpush1.bf16.msra.mxu0 %v258
  %289 = vmatprep.subr.bf16.mxu0 0
  %290 = vmatpush1.bf16.msra.mxu0 %v259
  %291 = vmatprep.subr.bf16.mxu0 0
  %292 = vmatpush1.bf16.msra.mxu0 %v260
  %293 = vmatprep.subr.bf16.mxu0 0
  %294 = vmatpush1.bf16.msra.mxu0 %v261
  %295 = vmatprep.subr.bf16.mxu0 0
  %296 = vmatpush1.bf16.msra.mxu0 0
  %297 = vmatprep.subr.bf16.mxu0 0
  %298 = vmatpush1.bf16.msra.mxu0 0
  %299 = vmatprep.subr.bf16.mxu0 0
  %300 = vmatpush1.bf16.msra.mxu0 0
  %301 = vmatprep.subr.bf16.mxu0 0
  %302 = vmatpush1.bf16.msra.mxu0 0
  %303 = vmatprep.subr.bf16.mxu0 0
  %304 = vmatpush1.bf16.msra.mxu0 0
  %305 = vmatprep.subr.bf16.mxu0 0
  %306 = vmatpush1.bf16.msra.mxu0 0
  %307 = vmatprep.subr.bf16.mxu0 0
  %308 = vmatpush1.bf16.msra.mxu0 0
  %309 = vmatprep.mubr.bf16.mxu0 %v272
  %310 = vmatmul.mubr.bf16.gmra.mrb[0].mxu0 %v194
  %v311 = vpop.f32.mrb[0].mxu0
  %v312 = vadd.f32 0.0, %v311
  %v313 = vpop.f32.mrb[0].mxu0
  %v314 = vpop.f32.mrb[0].mxu0
  %v315 = vadd.f32 0.0, %v314
  %v316 = vpop.f32.mrb[0].mxu0
  %317 = vmatprep.mubr.bf16.mxu0 %v275
  %318 = vmatmul.mubr.bf16.gmra.mrb[0].mxu0 %v196
  %v319 = vpop.f32.mrb[0].mxu0
  %v320 = vadd.f32 0.0, %v319
  %v321 = vpop.f32.mrb[0].mxu0
  %v322 = vpop.f32.mrb[0].mxu0
  %v323 = vadd.f32 0.0, %v322
  %v324 = vpop.f32.mrb[0].mxu0
  %325 = vdwg.mxu0
  %v344 = vunpack.c.l.b16 %v127
  %v345 = vunpack.c.l.b16 %v128
  %v346 = vunpack.c.l.b16 %v129
  %v347 = vunpack.c.l.b16 %v130
  %v348 = vunpack.c.l.b16 %v131
  %v349 = vunpack.c.l.b16 %v132
  %v350 = vunpack.c.l.b16 %v133
  %v351 = vunpack.c.l.b16 %v134
  %v352 = vunpack.c.l.b16 %v135
  %v353 = vunpack.c.l.b16 %v136
  %v354 = vunpack.c.l.b16 %v137
  %v355 = vunpack.c.l.b16 %v138
  %v356 = vunpack.c.l.b16 %v139
  %v357 = vunpack.c.l.b16 %v140
  %v358 = vunpack.c.l.b16 %v141
  %v359 = vunpack.c.l.b16 %v142
  %v360 = vunpack.c.l.b16 %v143
  %v361 = vunpack.c.l.b16 %v144
  %v362 = vpack.c.b16 %v345, %v344
  %v363 = vpack.c.b16 %v347, %v346
  %v364 = vpack.c.b16 %v349, %v348
  %v365 = vpack.c.b16 %v351, %v350
  %v366 = vpack.c.b16 %v353, %v352
  %v367 = vpack.c.b16 %v355, %v354
  %v368 = vpack.c.b16 %v357, %v356
  %v369 = vpack.c.b16 %v359, %v358
  %v370 = vpack.c.b16 %v361, %v360
  %v381 = vsel %vm34, %v124, 0
  %v384 = vsel %vm34, %v126, 0
  %386 = vmatprep.subr.bf16.mxu0 0
  %387 = vmatpush1.bf16.msra.mxu0 %v362
  %388 = vmatprep.subr.bf16.mxu0 0
  %389 = vmatpush1.bf16.msra.mxu0 %v363
  %390 = vmatprep.subr.bf16.mxu0 0
  %391 = vmatpush1.bf16.msra.mxu0 %v364
  %392 = vmatprep.subr.bf16.mxu0 0
  %393 = vmatpush1.bf16.msra.mxu0 %v365
  %394 = vmatprep.subr.bf16.mxu0 0
  %395 = vmatpush1.bf16.msra.mxu0 %v366
  %396 = vmatprep.subr.bf16.mxu0 0
  %397 = vmatpush1.bf16.msra.mxu0 %v367
  %398 = vmatprep.subr.bf16.mxu0 0
  %399 = vmatpush1.bf16.msra.mxu0 %v368
  %400 = vmatprep.subr.bf16.mxu0 0
  %401 = vmatpush1.bf16.msra.mxu0 %v369
  %402 = vmatprep.subr.bf16.mxu0 0
  %403 = vmatpush1.bf16.msra.mxu0 %v370
  %404 = vmatprep.subr.bf16.mxu0 0
  %405 = vmatpush1.bf16.msra.mxu0 0
  %406 = vmatprep.subr.bf16.mxu0 0
  %407 = vmatpush1.bf16.msra.mxu0 0
  %408 = vmatprep.subr.bf16.mxu0 0
  %409 = vmatpush1.bf16.msra.mxu0 0
  %410 = vmatprep.subr.bf16.mxu0 0
  %411 = vmatpush1.bf16.msra.mxu0 0
  %412 = vmatprep.subr.bf16.mxu0 0
  %413 = vmatpush1.bf16.msra.mxu0 0
  %414 = vmatprep.subr.bf16.mxu0 0
  %415 = vmatpush1.bf16.msra.mxu0 0
  %416 = vmatprep.subr.bf16.mxu0 0
  %417 = vmatpush1.bf16.msra.mxu0 0
  %418 = vmatprep.mubr.bf16.mxu0 %v381
  %419 = vmatmul.mubr.bf16.gmra.mrb[0].mxu0 %v123
  %v420 = vpop.f32.mrb[0].mxu0
  %v421 = vadd.f32 %v312, %v420
  %v422 = vpop.f32.mrb[0].mxu0
  %v423 = vpop.f32.mrb[0].mxu0
  %v424 = vadd.f32 %v315, %v423
  %v425 = vpop.f32.mrb[0].mxu0
  %426 = vmatprep.mubr.bf16.mxu0 %v384
  %427 = vmatmul.mubr.bf16.gmra.mrb[0].mxu0 %v125
  %v428 = vpop.f32.mrb[0].mxu0
  %v429 = vadd.f32 %v320, %v428
  %v430 = vpop.f32.mrb[0].mxu0
  %v431 = vpop.f32.mrb[0].mxu0
  %v432 = vadd.f32 %v323, %v431
  %v433 = vpop.f32.mrb[0].mxu0
  %434 = vdwg.mxu0
  %v435 = vld [vmem:[#allocation2] sm:$0xfc]
  %v436 = vld [vmem:[#allocation2 + $0x8] sm:$0xfc]
  %v437 = vld [vmem:[#allocation2 + $0x20] sm:$0x3]
  %v438 = vld [vmem:[#allocation2 + $0x28] sm:$0x3]
  %v439 = vld [vmem:[#allocation2 + $0x30] sm:$0xfc]
  %v440 = vld [vmem:[#allocation2 + $0x38] sm:$0xfc]
  %v441 = vld [vmem:[#allocation2 + $0x50] sm:$0x3]
  %v442 = vld [vmem:[#allocation2 + $0x58] sm:$0x3]
  %vm451 = vcmask 1045504
  %v452 = vrot.slane %v435, 2
  %v453 = vrot.slane %v117, 2
  %v454 = vsel %vm451, %v452, %v453
  %v455 = vrot.slane %v436, 2
  %v456 = vrot.slane %v118, 2
  %v457 = vsel %vm451, %v455, %v456
  %v458 = vrot.slane %v437, 2
  %v459 = vsel %vm451, %v453, %v458
  %v460 = vrot.slane %v438, 2
  %v461 = vsel %vm451, %v456, %v460
  %v462 = vrot.slane %v439, 2
  %v463 = vrot.slane %v121, 2
  %v464 = vsel %vm451, %v462, %v463
  %v465 = vrot.slane %v440, 2
  %v466 = vrot.slane %v122, 2
  %v467 = vsel %vm451, %v465, %v466
  %v468 = vrot.slane %v441, 2
  %v469 = vsel %vm451, %v463, %v468
  %v470 = vrot.slane %v442, 2
  %v471 = vsel %vm451, %v466, %v470
  %v480 = vpack.c.bf16 %v459, %v454
  %v481 = vpack.c.bf16 %v461, %v457
  %v482 = vpack.c.bf16 %v469, %v464
  %v483 = vpack.c.bf16 %v471, %v467
  %s484 = scalar_lea.vmem %s1, 144
  %v485 = vld [vmem:[%s484] sm:$0xf]
  %v486 = vld [vmem:[%s484 + $0x4] sm:$0xf]
  %v487 = vld [vmem:[%s484 + $0x8] sm:$0xf]
  %v488 = vld [vmem:[%s484 + $0xc] sm:$0xf]
  %v489 = vld [vmem:[%s484 + $0x10] sm:$0xf]
  %v490 = vld [vmem:[%s484 + $0x14] sm:$0xf]
  %v491 = vld [vmem:[%s484 + $0x18] sm:$0xf]
  %v492 = vld [vmem:[%s484 + $0x1c] sm:$0xf]
  %v493 = vld [vmem:[%s484 + $0x20] sm:$0xf]
  %v494 = vld [vmem:[%s484 + $0x24] sm:$0xf]
  %v495 = vld [vmem:[%s484 + $0x28] sm:$0xf]
  %v496 = vld [vmem:[%s484 + $0x2c] sm:$0xf]
  %v497 = vld [vmem:[%s484 + $0x30] sm:$0xf]
  %v498 = vld [vmem:[%s484 + $0x34] sm:$0xf]
  %v499 = vld [vmem:[%s484 + $0x38] sm:$0xf]
  %v500 = vld [vmem:[%s484 + $0x3c] sm:$0xf]
  %v501 = vld [vmem:[%s484 + $0x40] sm:$0xf]
  %v502 = vld [vmem:[%s484 + $0x44] sm:$0xf]
  %v521 = vunpack.c.l.b16 %v485
  %v522 = vunpack.c.l.b16 %v486
  %v523 = vunpack.c.l.b16 %v487
  %v524 = vunpack.c.l.b16 %v488
  %v525 = vunpack.c.l.b16 %v489
  %v526 = vunpack.c.l.b16 %v490
  %v527 = vunpack.c.l.b16 %v491
  %v528 = vunpack.c.l.b16 %v492
  %v529 = vunpack.c.l.b16 %v493
  %v530 = vunpack.c.l.b16 %v494
  %v531 = vunpack.c.l.b16 %v495
  %v532 = vunpack.c.l.b16 %v496
  %v533 = vunpack.c.l.b16 %v497
  %v534 = vunpack.c.l.b16 %v498
  %v535 = vunpack.c.l.b16 %v499
  %v536 = vunpack.c.l.b16 %v500
  %v537 = vunpack.c.l.b16 %v501
  %v538 = vunpack.c.l.b16 %v502
  %v539 = vpack.c.b16 %v522, %v521
  %v540 = vpack.c.b16 %v524, %v523
  %v541 = vpack.c.b16 %v526, %v525
  %v542 = vpack.c.b16 %v528, %v527
  %v543 = vpack.c.b16 %v530, %v529
  %v544 = vpack.c.b16 %v532, %v531
  %v545 = vpack.c.b16 %v534, %v533
  %v546 = vpack.c.b16 %v536, %v535
  %v547 = vpack.c.b16 %v538, %v537
  %v558 = vsel %vm34, %v481, 0
  %v561 = vsel %vm34, %v483, 0
  %563 = vmatprep.subr.bf16.mxu0 0
  %564 = vmatpush1.bf16.msra.mxu0 %v539
  %565 = vmatprep.subr.bf16.mxu0 0
  %566 = vmatpush1.bf16.msra.mxu0 %v540
  %567 = vmatprep.subr.bf16.mxu0 0
  %568 = vmatpush1.bf16.msra.mxu0 %v541
  %569 = vmatprep.subr.bf16.mxu0 0
  %570 = vmatpush1.bf16.msra.mxu0 %v542
  %571 = vmatprep.subr.bf16.mxu0 0
  %572 = vmatpush1.bf16.msra.mxu0 %v543
  %573 = vmatprep.subr.bf16.mxu0 0
  %574 = vmatpush1.bf16.msra.mxu0 %v544
  %575 = vmatprep.subr.bf16.mxu0 0
  %576 = vmatpush1.bf16.msra.mxu0 %v545
  %577 = vmatprep.subr.bf16.mxu0 0
  %578 = vmatpush1.bf16.msra.mxu0 %v546
  %579 = vmatprep.subr.bf16.mxu0 0
  %580 = vmatpush1.bf16.msra.mxu0 %v547
  %581 = vmatprep.subr.bf16.mxu0 0
  %582 = vmatpush1.bf16.msra.mxu0 0
  %583 = vmatprep.subr.bf16.mxu0 0
  %584 = vmatpush1.bf16.msra.mxu0 0
  %585 = vmatprep.subr.bf16.mxu0 0
  %586 = vmatpush1.bf16.msra.mxu0 0
  %587 = vmatprep.subr.bf16.mxu0 0
  %588 = vmatpush1.bf16.msra.mxu0 0
  %589 = vmatprep.subr.bf16.mxu0 0
  %590 = vmatpush1.bf16.msra.mxu0 0
  %591 = vmatprep.subr.bf16.mxu0 0
  %592 = vmatpush1.bf16.msra.mxu0 0
  %593 = vmatprep.subr.bf16.mxu0 0
  %594 = vmatpush1.bf16.msra.mxu0 0
  %595 = vmatprep.mubr.bf16.mxu0 %v558
  %596 = vmatmul.mubr.bf16.gmra.mrb[0].mxu0 %v480
  %v597 = vpop.f32.mrb[0].mxu0
  %v598 = vadd.f32 0.0, %v597
  %v599 = vpop.f32.mrb[0].mxu0
  %v600 = vpop.f32.mrb[0].mxu0
  %v601 = vadd.f32 0.0, %v600
  %v602 = vpop.f32.mrb[0].mxu0
  %603 = vmatprep.mubr.bf16.mxu0 %v561
  %604 = vmatmul.mubr.bf16.gmra.mrb[0].mxu0 %v482
  %v605 = vpop.f32.mrb[0].mxu0
  %v606 = vadd.f32 0.0, %v605
  %v607 = vpop.f32.mrb[0].mxu0
  %v608 = vpop.f32.mrb[0].mxu0
  %v609 = vadd.f32 0.0, %v608
  %v610 = vpop.f32.mrb[0].mxu0
  %611 = vdwg.mxu0
  %v612 = vadd.f32 %v421, %v598
  %v613 = vadd.f32 %v424, %v601
  %v614 = vadd.f32 %v429, %v606
  %v615 = vadd.f32 %v432, %v609
  %v616 = vadd.f32 %v612, %v613
  %v617 = vadd.f32 %v616, %v614
  %v618 = vadd.f32 %v617, %v615
  %v619 = vrot.slane %v618, 4
  %v620 = vadd.f32 %v618, %v619
  %v621 = vrot.slane %v620, 2
  %v622 = vadd.f32 %v620, %v621
  %v623 = vrot.slane %v622, 1
  %v624 = vadd.f32 %v622, %v623
  %v625 = vmul.f32 %v612, %v612
  %v626 = vmul.f32 %v613, %v613
  %v627 = vmul.f32 %v614, %v614
  %v628 = vmul.f32 %v615, %v615
  %v629 = vadd.f32 %v625, %v626
  %v630 = vadd.f32 %v629, %v627
  %v631 = vadd.f32 %v630, %v628
  %v632 = vrot.slane %v631, 4
  %v633 = vadd.f32 %v631, %v632
  %v634 = vrot.slane %v633, 2
  %v635 = vadd.f32 %v633, %v634
  %v636 = vrot.slane %v635, 1
  %v637 = vadd.f32 %v635, %v636
  %638 = vmatprep.subr.mxu0 0.0
  %639 = vmatpush1.msra.mxu0 %v47
  %640 = vmatprep.subr.mxu0 0.0
  %641 = vmatpush1.msra.mxu0 %v48
  %642 = vmatprep.subr.mxu0 0.0
  %643 = vmatpush1.msra.mxu0 %v49
  %644 = vmatprep.subr.mxu0 0.0
  %645 = vmatpush1.msra.mxu0 %v50
  %646 = vmatprep.subr.mxu0 0.0
  %647 = vmatpush1.msra.mxu0 %v51
  %648 = vmatprep.subr.mxu0 0.0
  %649 = vmatpush1.msra.mxu0 %v52
  %650 = vmatprep.subr.mxu0 0.0
  %651 = vmatpush1.msra.mxu0 %v53
  %652 = vmatprep.subr.mxu0 0.0
  %653 = vmatpush1.msra.mxu0 %v54
  %654 = vmatprep.subr.mxu0 0.0
  %655 = vmatpush1.msra.mxu0 %v55
  %656 = vmatprep.subr.mxu0 0.0
  %657 = vmatpush1.msra.mxu0 %v56
  %658 = vmatprep.subr.mxu0 0.0
  %659 = vmatpush1.msra.mxu0 %v57
  %660 = vmatprep.subr.mxu0 0.0
  %661 = vmatpush1.msra.mxu0 %v58
  %662 = vmatprep.subr.mxu0 0.0
  %663 = vmatpush1.msra.mxu0 %v59
  %664 = vmatprep.subr.mxu0 0.0
  %665 = vmatpush1.msra.mxu0 %v60
  %666 = vmatprep.subr.mxu0 0.0
  %667 = vmatpush1.msra.mxu0 %v61
  %668 = vmatprep.subr.mxu0 0.0
  %669 = vmatpush1.msra.mxu0 %v62
  %670 = vmatprep.subr.mxu0 0.0
  %671 = vmatpush1.msra.mxu0 0.0
  %672 = vmatprep.subr.mxu0 0.0
  %673 = vmatpush1.msra.mxu0 0.0
  %674 = vmatprep.subr.mxu0 0.0
  %675 = vmatpush1.msra.mxu0 0.0
  %676 = vmatprep.subr.mxu0 0.0
  %677 = vmatpush1.msra.mxu0 0.0
  %678 = vmatprep.subr.mxu0 0.0
  %679 = vmatpush1.msra.mxu0 0.0
  %680 = vmatprep.subr.mxu0 0.0
  %681 = vmatpush1.msra.mxu0 0.0
  %682 = vmatprep.subr.mxu0 0.0
  %683 = vmatpush1.msra.mxu0 0.0
  %684 = vmatprep.subr.mxu0 0.0
  %685 = vmatpush1.msra.mxu0 0.0
  %686 = vmatprep.subr.mxu0 0.0
  %687 = vmatpush1.msra.mxu0 0.0
  %688 = vmatprep.subr.mxu0 0.0
  %689 = vmatpush1.msra.mxu0 0.0
  %690 = vmatprep.subr.mxu0 0.0
  %691 = vmatpush1.msra.mxu0 0.0
  %692 = vmatprep.subr.mxu0 0.0
  %693 = vmatpush1.msra.mxu0 0.0
  %694 = vmatprep.subr.mxu0 0.0
  %695 = vmatpush1.msra.mxu0 0.0
  %696 = vmatprep.subr.mxu0 0.0
  %697 = vmatpush1.msra.mxu0 0.0
  %698 = vmatprep.subr.mxu0 0.0
  %699 = vmatpush1.msra.mxu0 0.0
  %700 = vmatprep.subr.mxu0 0.0
  %701 = vmatpush1.msra.mxu0 0.0
  %702 = vmatprep.mubr.f32.mxu0 0.0
  %703 = vmatmul.mubr.f32.gmra.mrb[0].mxu0 %v624
  %v704 = vpop.f32.mrb[0].mxu0
  %v705 = vadd.f32 0.0, %v704
  %v706 = vpop.f32.mrb[0].mxu0
  %707 = vdwg.mxu0
  %708 = vmatprep.subr.mxu0 0.0
  %709 = vmatpush1.msra.mxu0 %v47
  %710 = vmatprep.subr.mxu0 0.0
  %711 = vmatpush1.msra.mxu0 %v48
  %712 = vmatprep.subr.mxu0 0.0
  %713 = vmatpush1.msra.mxu0 %v49
  %714 = vmatprep.subr.mxu0 0.0
  %715 = vmatpush1.msra.mxu0 %v50
  %716 = vmatprep.subr.mxu0 0.0
  %717 = vmatpush1.msra.mxu0 %v51
  %718 = vmatprep.subr.mxu0 0.0
  %719 = vmatpush1.msra.mxu0 %v52
  %720 = vmatprep.subr.mxu0 0.0
  %721 = vmatpush1.msra.mxu0 %v53
  %722 = vmatprep.subr.mxu0 0.0
  %723 = vmatpush1.msra.mxu0 %v54
  %724 = vmatprep.subr.mxu0 0.0
  %725 = vmatpush1.msra.mxu0 %v55
  %726 = vmatprep.subr.mxu0 0.0
  %727 = vmatpush1.msra.mxu0 %v56
  %728 = vmatprep.subr.mxu0 0.0
  %729 = vmatpush1.msra.mxu0 %v57
  %730 = vmatprep.subr.mxu0 0.0
  %731 = vmatpush1.msra.mxu0 %v58
  %732 = vmatprep.subr.mxu0 0.0
  %733 = vmatpush1.msra.mxu0 %v59
  %734 = vmatprep.subr.mxu0 0.0
  %735 = vmatpush1.msra.mxu0 %v60
  %736 = vmatprep.subr.mxu0 0.0
  %737 = vmatpush1.msra.mxu0 %v61
  %738 = vmatprep.subr.mxu0 0.0
  %739 = vmatpush1.msra.mxu0 %v62
  %740 = vmatprep.subr.mxu0 0.0
  %741 = vmatpush1.msra.mxu0 0.0
  %742 = vmatprep.subr.mxu0 0.0
  %743 = vmatpush1.msra.mxu0 0.0
  %744 = vmatprep.subr.mxu0 0.0
  %745 = vmatpush1.msra.mxu0 0.0
  %746 = vmatprep.subr.mxu0 0.0
  %747 = vmatpush1.msra.mxu0 0.0
  %748 = vmatprep.subr.mxu0 0.0
  %749 = vmatpush1.msra.mxu0 0.0
  %750 = vmatprep.subr.mxu0 0.0
  %751 = vmatpush1.msra.mxu0 0.0
  %752 = vmatprep.subr.mxu0 0.0
  %753 = vmatpush1.msra.mxu0 0.0
  %754 = vmatprep.subr.mxu0 0.0
  %755 = vmatpush1.msra.mxu0 0.0
  %756 = vmatprep.subr.mxu0 0.0
  %757 = vmatpush1.msra.mxu0 0.0
  %758 = vmatprep.subr.mxu0 0.0
  %759 = vmatpush1.msra.mxu0 0.0
  %760 = vmatprep.subr.mxu0 0.0
  %761 = vmatpush1.msra.mxu0 0.0
  %762 = vmatprep.subr.mxu0 0.0
  %763 = vmatpush1.msra.mxu0 0.0
  %764 = vmatprep.subr.mxu0 0.0
  %765 = vmatpush1.msra.mxu0 0.0
  %766 = vmatprep.subr.mxu0 0.0
  %767 = vmatpush1.msra.mxu0 0.0
  %768 = vmatprep.subr.mxu0 0.0
  %769 = vmatpush1.msra.mxu0 0.0
  %770 = vmatprep.subr.mxu0 0.0
  %771 = vmatpush1.msra.mxu0 0.0
  %772 = vmatprep.mubr.f32.mxu0 0.0
  %773 = vmatmul.mubr.f32.gmra.mrb[0].mxu0 %v637
  %v774 = vpop.f32.mrb[0].mxu0
  %v775 = vadd.f32 0.0, %v774
  %v776 = vpop.f32.mrb[0].mxu0
  %777 = vdwg.mxu0
  %v778 = vmul.f32 %v705, 0.001953125
  %v779 = vmul.f32 %v775, 0.001953125
  %v780 = vmul.f32 %v778, %v778
  %v781 = vsub.f32 %v779, %v780
  %v782 = vld [vmem:[%s3] sm:$0x1]
  %v783 = vadd.f32 %v781, 1e-05
  %v784 = vrsqrt.pop %v783
  %v785 = vmul.f32 %v782, %v784
  %v786 = vld [vmem:[%s4] sm:$0x1]
  %v787 = vmul.f32 %v778, %v785
  %v788 = vsub.f32 %v786, %v787
  %v790 = vsel %vm103, %v785, 0
  %792 = vmatprep.subr.mxu0 0.0
  %793 = vmatpush1.msra.mxu0 %v63
  %794 = vmatprep.subr.mxu0 0.0
  %795 = vmatpush1.msra.mxu0 0.0
  %796 = vmatprep.subr.mxu0 0.0
  %797 = vmatpush1.msra.mxu0 0.0
  %798 = vmatprep.subr.mxu0 0.0
  %799 = vmatpush1.msra.mxu0 0.0
  %800 = vmatprep.subr.mxu0 0.0
  %801 = vmatpush1.msra.mxu0 0.0
  %802 = vmatprep.subr.mxu0 0.0
  %803 = vmatpush1.msra.mxu0 0.0
  %804 = vmatprep.subr.mxu0 0.0
  %805 = vmatpush1.msra.mxu0 0.0
  %806 = vmatprep.subr.mxu0 0.0
  %807 = vmatpush1.msra.mxu0 0.0
  %808 = vmatprep.subr.mxu0 0.0
  %809 = vmatpush1.msra.mxu0 0.0
  %810 = vmatprep.subr.mxu0 0.0
  %811 = vmatpush1.msra.mxu0 0.0
  %812 = vmatprep.subr.mxu0 0.0
  %813 = vmatpush1.msra.mxu0 0.0
  %814 = vmatprep.subr.mxu0 0.0
  %815 = vmatpush1.msra.mxu0 0.0
  %816 = vmatprep.subr.mxu0 0.0
  %817 = vmatpush1.msra.mxu0 0.0
  %818 = vmatprep.subr.mxu0 0.0
  %819 = vmatpush1.msra.mxu0 0.0
  %820 = vmatprep.subr.mxu0 0.0
  %821 = vmatpush1.msra.mxu0 0.0
  %822 = vmatprep.subr.mxu0 0.0
  %823 = vmatpush1.msra.mxu0 0.0
  %824 = vmatprep.subr.mxu0 0.0
  %825 = vmatpush1.msra.mxu0 0.0
  %826 = vmatprep.subr.mxu0 0.0
  %827 = vmatpush1.msra.mxu0 0.0
  %828 = vmatprep.subr.mxu0 0.0
  %829 = vmatpush1.msra.mxu0 0.0
  %830 = vmatprep.subr.mxu0 0.0
  %831 = vmatpush1.msra.mxu0 0.0
  %832 = vmatprep.subr.mxu0 0.0
  %833 = vmatpush1.msra.mxu0 0.0
  %834 = vmatprep.subr.mxu0 0.0
  %835 = vmatpush1.msra.mxu0 0.0
  %836 = vmatprep.subr.mxu0 0.0
  %837 = vmatpush1.msra.mxu0 0.0
  %838 = vmatprep.subr.mxu0 0.0
  %839 = vmatpush1.msra.mxu0 0.0
  %840 = vmatprep.subr.mxu0 0.0
  %841 = vmatpush1.msra.mxu0 0.0
  %842 = vmatprep.subr.mxu0 0.0
  %843 = vmatpush1.msra.mxu0 0.0
  %844 = vmatprep.subr.mxu0 0.0
  %845 = vmatpush1.msra.mxu0 0.0
  %846 = vmatprep.subr.mxu0 0.0
  %847 = vmatpush1.msra.mxu0 0.0
  %848 = vmatprep.subr.mxu0 0.0
  %849 = vmatpush1.msra.mxu0 0.0
  %850 = vmatprep.subr.mxu0 0.0
  %851 = vmatpush1.msra.mxu0 0.0
  %852 = vmatprep.subr.mxu0 0.0
  %853 = vmatpush1.msra.mxu0 0.0
  %854 = vmatprep.subr.mxu0 0.0
  %855 = vmatpush1.msra.mxu0 0.0
  %856 = vmatprep.mubr.f32.mxu0 0.0
  %857 = vmatmul.mubr.f32.gmra.mrb[0].mxu0 %v790
  %v858 = vpop.f32.mrb[0].mxu0
  %v859 = vadd.f32 0.0, %v858
  %v860 = vpop.f32.mrb[0].mxu0
  %861 = vdwg.mxu0
  %v863 = vsel %vm103, %v788, 0
  %865 = vmatprep.subr.mxu0 0.0
  %866 = vmatpush1.msra.mxu0 %v63
  %867 = vmatprep.subr.mxu0 0.0
  %868 = vmatpush1.msra.mxu0 0.0
  %869 = vmatprep.subr.mxu0 0.0
  %870 = vmatpush1.msra.mxu0 0.0
  %871 = vmatprep.subr.mxu0 0.0
  %872 = vmatpush1.msra.mxu0 0.0
  %873 = vmatprep.subr.mxu0 0.0
  %874 = vmatpush1.msra.mxu0 0.0
  %875 = vmatprep.subr.mxu0 0.0
  %876 = vmatpush1.msra.mxu0 0.0
  %877 = vmatprep.subr.mxu0 0.0
  %878 = vmatpush1.msra.mxu0 0.0
  %879 = vmatprep.subr.mxu0 0.0
  %880 = vmatpush1.msra.mxu0 0.0
  %881 = vmatprep.subr.mxu0 0.0
  %882 = vmatpush1.msra.mxu0 0.0
  %883 = vmatprep.subr.mxu0 0.0
  %884 = vmatpush1.msra.mxu0 0.0
  %885 = vmatprep.subr.mxu0 0.0
  %886 = vmatpush1.msra.mxu0 0.0
  %887 = vmatprep.subr.mxu0 0.0
  %888 = vmatpush1.msra.mxu0 0.0
  %889 = vmatprep.subr.mxu0 0.0
  %890 = vmatpush1.msra.mxu0 0.0
  %891 = vmatprep.subr.mxu0 0.0
  %892 = vmatpush1.msra.mxu0 0.0
  %893 = vmatprep.subr.mxu0 0.0
  %894 = vmatpush1.msra.mxu0 0.0
  %895 = vmatprep.subr.mxu0 0.0
  %896 = vmatpush1.msra.mxu0 0.0
  %897 = vmatprep.subr.mxu0 0.0
  %898 = vmatpush1.msra.mxu0 0.0
  %899 = vmatprep.subr.mxu0 0.0
  %900 = vmatpush1.msra.mxu0 0.0
  %901 = vmatprep.subr.mxu0 0.0
  %902 = vmatpush1.msra.mxu0 0.0
  %903 = vmatprep.subr.mxu0 0.0
  %904 = vmatpush1.msra.mxu0 0.0
  %905 = vmatprep.subr.mxu0 0.0
  %906 = vmatpush1.msra.mxu0 0.0
  %907 = vmatprep.subr.mxu0 0.0
  %908 = vmatpush1.msra.mxu0 0.0
  %909 = vmatprep.subr.mxu0 0.0
  %910 = vmatpush1.msra.mxu0 0.0
  %911 = vmatprep.subr.mxu0 0.0
  %912 = vmatpush1.msra.mxu0 0.0
  %913 = vmatprep.subr.mxu0 0.0
  %914 = vmatpush1.msra.mxu0 0.0
  %915 = vmatprep.subr.mxu0 0.0
  %916 = vmatpush1.msra.mxu0 0.0
  %917 = vmatprep.subr.mxu0 0.0
  %918 = vmatpush1.msra.mxu0 0.0
  %919 = vmatprep.subr.mxu0 0.0
  %920 = vmatpush1.msra.mxu0 0.0
  %921 = vmatprep.subr.mxu0 0.0
  %922 = vmatpush1.msra.mxu0 0.0
  %923 = vmatprep.subr.mxu0 0.0
  %924 = vmatpush1.msra.mxu0 0.0
  %925 = vmatprep.subr.mxu0 0.0
  %926 = vmatpush1.msra.mxu0 0.0
  %927 = vmatprep.subr.mxu0 0.0
  %928 = vmatpush1.msra.mxu0 0.0
  %929 = vmatprep.mubr.f32.mxu0 0.0
  %930 = vmatmul.mubr.f32.gmra.mrb[0].mxu0 %v863
  %v931 = vpop.f32.mrb[0].mxu0
  %v932 = vadd.f32 0.0, %v931
  %v933 = vpop.f32.mrb[0].mxu0
  %934 = vdwg.mxu0
  %v935 = vlaneseq
  %v936 = vshrl.u32 %v935, 7
  %v937 = vsub.s32 0, %v936
  %v938 = vrot.slane %v859, %v937
  %v939 = vmul.f32 %v612, %v938
  %v940 = vmul.f32 %v613, %v938
  %v941 = vmul.f32 %v614, %v938
  %v942 = vmul.f32 %v615, %v938
  %v943 = vlaneseq
  %v944 = vshrl.u32 %v943, 7
  %v945 = vsub.s32 0, %v944
  %v946 = vrot.slane %v932, %v945
  %v947 = vadd.f32 %v939, %v946
  %v948 = vadd.f32 %v940, %v946
  %v949 = vadd.f32 %v941, %v946
  %v950 = vadd.f32 %v942, %v946
  %v951 = vmax.f32 %v947, 0.0
  %v952 = vmax.f32 %v948, 0.0
  %v953 = vmax.f32 %v949, 0.0
  %v954 = vmax.f32 %v950, 0.0
  %v959 = vrot.slane %v951, 7
  %v960 = vrot.slane %v952, 7
  %v961 = vsel %vm72, %v959, %v960
  %v962 = vrot.slane %v953, 7
  %v963 = vrot.slane %v954, 7
  %v964 = vsel %vm72, %v962, %v963
  %965 = vrot.lane.b32.xlu0 %v959, 8
  %v966 = vpop.permute.xlu0 %965
  %967 = vrot.lane.b32.xlu0 %v961, 8
  %v968 = vpop.permute.xlu0 %967
  %969 = vrot.lane.b32.xlu0 %v960, 8
  %v970 = vpop.permute.xlu0 %969
  %971 = vrot.lane.b32.xlu0 %v962, 8
  %v972 = vpop.permute.xlu0 %971
  %973 = vrot.lane.b32.xlu0 %v964, 8
  %v974 = vpop.permute.xlu0 %973
  %975 = vrot.lane.b32.xlu0 %v963, 8
  %v976 = vpop.permute.xlu0 %975
  %983 = vst.msk [vmem:[#allocation2] sm:$0xfe] %vm97, %v966
  %984 = vst.msk [vmem:[#allocation2 + $0x8] sm:$0xfe] %vm99, %v966
  %985 = vst.msk [vmem:[#allocation2 + $0x10] sm:$0xff] %vm101, %v968
  %986 = vst.msk [vmem:[#allocation2 + $0x18] sm:$0xff] %vm103, %v968
  %987 = vst.msk [vmem:[#allocation2 + $0x20] sm:$0x1] %vm105, %v970
  %988 = vst.msk [vmem:[#allocation2 + $0x28] sm:$0x1] %vm107, %v970
  %989 = vst.msk [vmem:[#allocation2 + $0x30] sm:$0xfe] %vm97, %v972
  %990 = vst.msk [vmem:[#allocation2 + $0x38] sm:$0xfe] %vm99, %v972
  %991 = vst.msk [vmem:[#allocation2 + $0x40] sm:$0xff] %vm101, %v974
  %992 = vst.msk [vmem:[#allocation2 + $0x48] sm:$0xff] %vm103, %v974
  %993 = vst.msk [vmem:[#allocation2 + $0x50] sm:$0x1] %vm105, %v976
  %994 = vst.msk [vmem:[#allocation2 + $0x58] sm:$0x1] %vm107, %v976
  %v995 = vld [vmem:[#allocation2] sm:$0xff]
  %v996 = vld [vmem:[#allocation2 + $0x8] sm:$0xff]
  %v997 = vld [vmem:[#allocation2 + $0x10] sm:$0xff]
  %v998 = vld [vmem:[#allocation2 + $0x18] sm:$0xff]
  %v999 = vld [vmem:[#allocation2 + $0x30] sm:$0xff]
  %v1000 = vld [vmem:[#allocation2 + $0x38] sm:$0xff]
  %v1001 = vld [vmem:[#allocation2 + $0x40] sm:$0xff]
  %v1002 = vld [vmem:[#allocation2 + $0x48] sm:$0xff]
  %v1003 = vpack.c.bf16 %v997, %v995
  %v1004 = vpack.c.bf16 %v998, %v996
  %v1005 = vpack.c.bf16 %v1001, %v999
  %v1006 = vpack.c.bf16 %v1002, %v1000
  %v1007 = vld [vmem:[%s2] sm:$0xf]
  %v1008 = vld [vmem:[%s2 + $0x4] sm:$0xf]
  %v1009 = vld [vmem:[%s2 + $0x8] sm:$0xf]
  %v1010 = vld [vmem:[%s2 + $0xc] sm:$0xf]
  %v1011 = vld [vmem:[%s2 + $0x10] sm:$0xf]
  %v1012 = vld [vmem:[%s2 + $0x14] sm:$0xf]
  %v1013 = vld [vmem:[%s2 + $0x18] sm:$0xf]
  %v1014 = vld [vmem:[%s2 + $0x1c] sm:$0xf]
  %v1015 = vld [vmem:[%s2 + $0x20] sm:$0xf]
  %v1016 = vld [vmem:[%s2 + $0x24] sm:$0xf]
  %v1017 = vld [vmem:[%s2 + $0x28] sm:$0xf]
  %v1018 = vld [vmem:[%s2 + $0x2c] sm:$0xf]
  %v1019 = vld [vmem:[%s2 + $0x30] sm:$0xf]
  %v1020 = vld [vmem:[%s2 + $0x34] sm:$0xf]
  %v1021 = vld [vmem:[%s2 + $0x38] sm:$0xf]
  %v1022 = vld [vmem:[%s2 + $0x3c] sm:$0xf]
  %v1023 = vld [vmem:[%s2 + $0x40] sm:$0xf]
  %v1024 = vld [vmem:[%s2 + $0x44] sm:$0xf]
  %v1025 = vld [vmem:[#allocation2] sm:$0xfe]
  %v1026 = vld [vmem:[#allocation2 + $0x8] sm:$0xfe]
  %v1027 = vld [vmem:[#allocation2 + $0x20] sm:$0x1]
  %v1028 = vld [vmem:[#allocation2 + $0x28] sm:$0x1]
  %v1029 = vld [vmem:[#allocation2 + $0x30] sm:$0xfe]
  %v1030 = vld [vmem:[#allocation2 + $0x38] sm:$0xfe]
  %v1031 = vld [vmem:[#allocation2 + $0x50] sm:$0x1]
  %v1032 = vld [vmem:[#allocation2 + $0x58] sm:$0x1]
  %v1045 = vrot.slane %v1025, 1
  %v1046 = vrot.slane %v997, 1
  %v1047 = vsel %vm165, %v1045, %v1046
  %v1048 = vrot.slane %v1026, 1
  %v1049 = vrot.slane %v998, 1
  %v1050 = vsel %vm165, %v1048, %v1049
  %v1051 = vrot.slane %v1027, 1
  %v1052 = vsel %vm165, %v1046, %v1051
  %v1053 = vrot.slane %v1028, 1
  %v1054 = vsel %vm165, %v1049, %v1053
  %v1055 = vrot.slane %v1029, 1
  %v1056 = vrot.slane %v1001, 1
  %v1057 = vsel %vm165, %v1055, %v1056
  %v1058 = vrot.slane %v1030, 1
  %v1059 = vrot.slane %v1002, 1
  %v1060 = vsel %vm165, %v1058, %v1059
  %v1061 = vrot.slane %v1031, 1
  %v1062 = vsel %vm165, %v1056, %v1061
  %v1063 = vrot.slane %v1032, 1
  %v1064 = vsel %vm165, %v1059, %v1063
  %v1073 = vpack.c.bf16 %v1052, %v1047
  %v1074 = vpack.c.bf16 %v1054, %v1050
  %v1075 = vpack.c.bf16 %v1062, %v1057
  %v1076 = vpack.c.bf16 %v1064, %v1060
  %s1077 = scalar_lea.vmem %s2, 72
  %v1078 = vld [vmem:[%s1077] sm:$0xf]
  %v1079 = vld [vmem:[%s1077 + $0x4] sm:$0xf]
  %v1080 = vld [vmem:[%s1077 + $0x8] sm:$0xf]
  %v1081 = vld [vmem:[%s1077 + $0xc] sm:$0xf]
  %v1082 = vld [vmem:[%s1077 + $0x10] sm:$0xf]
  %v1083 = vld [vmem:[%s1077 + $0x14] sm:$0xf]
  %v1084 = vld [vmem:[%s1077 + $0x18] sm:$0xf]
  %v1085 = vld [vmem:[%s1077 + $0x1c] sm:$0xf]
  %v1086 = vld [vmem:[%s1077 + $0x20] sm:$0xf]
  %v1087 = vld [vmem:[%s1077 + $0x24] sm:$0xf]
  %v1088 = vld [vmem:[%s1077 + $0x28] sm:$0xf]
  %v1089 = vld [vmem:[%s1077 + $0x2c] sm:$0xf]
  %v1090 = vld [vmem:[%s1077 + $0x30] sm:$0xf]
  %v1091 = vld [vmem:[%s1077 + $0x34] sm:$0xf]
  %v1092 = vld [vmem:[%s1077 + $0x38] sm:$0xf]
  %v1093 = vld [vmem:[%s1077 + $0x3c] sm:$0xf]
  %v1094 = vld [vmem:[%s1077 + $0x40] sm:$0xf]
  %v1095 = vld [vmem:[%s1077 + $0x44] sm:$0xf]
  %v1114 = vunpack.c.l.b16 %v1078
  %v1115 = vunpack.c.l.b16 %v1079
  %v1116 = vunpack.c.l.b16 %v1080
  %v1117 = vunpack.c.l.b16 %v1081
  %v1118 = vunpack.c.l.b16 %v1082
  %v1119 = vunpack.c.l.b16 %v1083
  %v1120 = vunpack.c.l.b16 %v1084
  %v1121 = vunpack.c.l.b16 %v1085
  %v1122 = vunpack.c.l.b16 %v1086
  %v1123 = vunpack.c.l.b16 %v1087
  %v1124 = vunpack.c.l.b16 %v1088
  %v1125 = vunpack.c.l.b16 %v1089
  %v1126 = vunpack.c.l.b16 %v1090
  %v1127 = vunpack.c.l.b16 %v1091
  %v1128 = vunpack.c.l.b16 %v1092
  %v1129 = vunpack.c.l.b16 %v1093
  %v1130 = vunpack.c.l.b16 %v1094
  %v1131 = vunpack.c.l.b16 %v1095
  %v1132 = vpack.c.b16 %v1115, %v1114
  %v1133 = vpack.c.b16 %v1117, %v1116
  %v1134 = vpack.c.b16 %v1119, %v1118
  %v1135 = vpack.c.b16 %v1121, %v1120
  %v1136 = vpack.c.b16 %v1123, %v1122
  %v1137 = vpack.c.b16 %v1125, %v1124
  %v1138 = vpack.c.b16 %v1127, %v1126
  %v1139 = vpack.c.b16 %v1129, %v1128
  %v1140 = vpack.c.b16 %v1131, %v1130
  %v1151 = vsel %vm34, %v1074, 0
  %v1154 = vsel %vm34, %v1076, 0
  %1156 = vmatprep.subr.bf16.mxu0 0
  %1157 = vmatpush1.bf16.msra.mxu0 %v1132
  %1158 = vmatprep.subr.bf16.mxu0 0
  %1159 = vmatpush1.bf16.msra.mxu0 %v1133
  %1160 = vmatprep.subr.bf16.mxu0 0
  %1161 = vmatpush1.bf16.msra.mxu0 %v1134
  %1162 = vmatprep.subr.bf16.mxu0 0
  %1163 = vmatpush1.bf16.msra.mxu0 %v1135
  %1164 = vmatprep.subr.bf16.mxu0 0
  %1165 = vmatpush1.bf16.msra.mxu0 %v1136
  %1166 = vmatprep.subr.bf16.mxu0 0
  %1167 = vmatpush1.bf16.msra.mxu0 %v1137
  %1168 = vmatprep.subr.bf16.mxu0 0
  %1169 = vmatpush1.bf16.msra.mxu0 %v1138
  %1170 = vmatprep.subr.bf16.mxu0 0
  %1171 = vmatpush1.bf16.msra.mxu0 %v1139
  %1172 = vmatprep.subr.bf16.mxu0 0
  %1173 = vmatpush1.bf16.msra.mxu0 %v1140
  %1174 = vmatprep.subr.bf16.mxu0 0
  %1175 = vmatpush1.bf16.msra.mxu0 0
  %1176 = vmatprep.subr.bf16.mxu0 0
  %1177 = vmatpush1.bf16.msra.mxu0 0
  %1178 = vmatprep.subr.bf16.mxu0 0
  %1179 = vmatpush1.bf16.msra.mxu0 0
  %1180 = vmatprep.subr.bf16.mxu0 0
  %1181 = vmatpush1.bf16.msra.mxu0 0
  %1182 = vmatprep.subr.bf16.mxu0 0
  %1183 = vmatpush1.bf16.msra.mxu0 0
  %1184 = vmatprep.subr.bf16.mxu0 0
  %1185 = vmatpush1.bf16.msra.mxu0 0
  %1186 = vmatprep.subr.bf16.mxu0 0
  %1187 = vmatpush1.bf16.msra.mxu0 0
  %1188 = vmatprep.mubr.bf16.mxu0 %v1151
  %1189 = vmatmul.mubr.bf16.gmra.mrb[0].mxu0 %v1073
  %v1190 = vpop.f32.mrb[0].mxu0
  %v1191 = vadd.f32 0.0, %v1190
  %v1192 = vpop.f32.mrb[0].mxu0
  %v1193 = vpop.f32.mrb[0].mxu0
  %v1194 = vadd.f32 0.0, %v1193
  %v1195 = vpop.f32.mrb[0].mxu0
  %1196 = vmatprep.mubr.bf16.mxu0 %v1154
  %1197 = vmatmul.mubr.bf16.gmra.mrb[0].mxu0 %v1075
  %v1198 = vpop.f32.mrb[0].mxu0
  %v1199 = vadd.f32 0.0, %v1198
  %v1200 = vpop.f32.mrb[0].mxu0
  %v1201 = vpop.f32.mrb[0].mxu0
  %v1202 = vadd.f32 0.0, %v1201
  %v1203 = vpop.f32.mrb[0].mxu0
  %1204 = vdwg.mxu0
  %v1223 = vunpack.c.l.b16 %v1007
  %v1224 = vunpack.c.l.b16 %v1008
  %v1225 = vunpack.c.l.b16 %v1009
  %v1226 = vunpack.c.l.b16 %v1010
  %v1227 = vunpack.c.l.b16 %v1011
  %v1228 = vunpack.c.l.b16 %v1012
  %v1229 = vunpack.c.l.b16 %v1013
  %v1230 = vunpack.c.l.b16 %v1014
  %v1231 = vunpack.c.l.b16 %v1015
  %v1232 = vunpack.c.l.b16 %v1016
  %v1233 = vunpack.c.l.b16 %v1017
  %v1234 = vunpack.c.l.b16 %v1018
  %v1235 = vunpack.c.l.b16 %v1019
  %v1236 = vunpack.c.l.b16 %v1020
  %v1237 = vunpack.c.l.b16 %v1021
  %v1238 = vunpack.c.l.b16 %v1022
  %v1239 = vunpack.c.l.b16 %v1023
  %v1240 = vunpack.c.l.b16 %v1024
  %v1241 = vpack.c.b16 %v1224, %v1223
  %v1242 = vpack.c.b16 %v1226, %v1225
  %v1243 = vpack.c.b16 %v1228, %v1227
  %v1244 = vpack.c.b16 %v1230, %v1229
  %v1245 = vpack.c.b16 %v1232, %v1231
  %v1246 = vpack.c.b16 %v1234, %v1233
  %v1247 = vpack.c.b16 %v1236, %v1235
  %v1248 = vpack.c.b16 %v1238, %v1237
  %v1249 = vpack.c.b16 %v1240, %v1239
  %v1260 = vsel %vm34, %v1004, 0
  %v1263 = vsel %vm34, %v1006, 0
  %1265 = vmatprep.subr.bf16.mxu0 0
  %1266 = vmatpush1.bf16.msra.mxu0 %v1241
  %1267 = vmatprep.subr.bf16.mxu0 0
  %1268 = vmatpush1.bf16.msra.mxu0 %v1242
  %1269 = vmatprep.subr.bf16.mxu0 0
  %1270 = vmatpush1.bf16.msra.mxu0 %v1243
  %1271 = vmatprep.subr.bf16.mxu0 0
  %1272 = vmatpush1.bf16.msra.mxu0 %v1244
  %1273 = vmatprep.subr.bf16.mxu0 0
  %1274 = vmatpush1.bf16.msra.mxu0 %v1245
  %1275 = vmatprep.subr.bf16.mxu0 0
  %1276 = vmatpush1.bf16.msra.mxu0 %v1246
  %1277 = vmatprep.subr.bf16.mxu0 0
  %1278 = vmatpush1.bf16.msra.mxu0 %v1247
  %1279 = vmatprep.subr.bf16.mxu0 0
  %1280 = vmatpush1.bf16.msra.mxu0 %v1248
  %1281 = vmatprep.subr.bf16.mxu0 0
  %1282 = vmatpush1.bf16.msra.mxu0 %v1249
  %1283 = vmatprep.subr.bf16.mxu0 0
  %1284 = vmatpush1.bf16.msra.mxu0 0
  %1285 = vmatprep.subr.bf16.mxu0 0
  %1286 = vmatpush1.bf16.msra.mxu0 0
  %1287 = vmatprep.subr.bf16.mxu0 0
  %1288 = vmatpush1.bf16.msra.mxu0 0
  %1289 = vmatprep.subr.bf16.mxu0 0
  %1290 = vmatpush1.bf16.msra.mxu0 0
  %1291 = vmatprep.subr.bf16.mxu0 0
  %1292 = vmatpush1.bf16.msra.mxu0 0
  %1293 = vmatprep.subr.bf16.mxu0 0
  %1294 = vmatpush1.bf16.msra.mxu0 0
  %1295 = vmatprep.subr.bf16.mxu0 0
  %1296 = vmatpush1.bf16.msra.mxu0 0
  %1297 = vmatprep.mubr.bf16.mxu0 %v1260
  %1298 = vmatmul.mubr.bf16.gmra.mrb[0].mxu0 %v1003
  %v1299 = vpop.f32.mrb[0].mxu0
  %v1300 = vadd.f32 %v1191, %v1299
  %v1301 = vpop.f32.mrb[0].mxu0
  %v1302 = vpop.f32.mrb[0].mxu0
  %v1303 = vadd.f32 %v1194, %v1302
  %v1304 = vpop.f32.mrb[0].mxu0
  %1305 = vmatprep.mubr.bf16.mxu0 %v1263
  %1306 = vmatmul.mubr.bf16.gmra.mrb[0].mxu0 %v1005
  %v1307 = vpop.f32.mrb[0].mxu0
  %v1308 = vadd.f32 %v1199, %v1307
  %v1309 = vpop.f32.mrb[0].mxu0
  %v1310 = vpop.f32.mrb[0].mxu0
  %v1311 = vadd.f32 %v1202, %v1310
  %v1312 = vpop.f32.mrb[0].mxu0
  %1313 = vdwg.mxu0
  %v1314 = vld [vmem:[#allocation2] sm:$0xfc]
  %v1315 = vld [vmem:[#allocation2 + $0x8] sm:$0xfc]
  %v1316 = vld [vmem:[#allocation2 + $0x20] sm:$0x3]
  %v1317 = vld [vmem:[#allocation2 + $0x28] sm:$0x3]
  %v1318 = vld [vmem:[#allocation2 + $0x30] sm:$0xfc]
  %v1319 = vld [vmem:[#allocation2 + $0x38] sm:$0xfc]
  %v1320 = vld [vmem:[#allocation2 + $0x50] sm:$0x3]
  %v1321 = vld [vmem:[#allocation2 + $0x58] sm:$0x3]
  %v1330 = vrot.slane %v1314, 2
  %v1331 = vrot.slane %v997, 2
  %v1332 = vsel %vm451, %v1330, %v1331
  %v1333 = vrot.slane %v1315, 2
  %v1334 = vrot.slane %v998, 2
  %v1335 = vsel %vm451, %v1333, %v1334
  %v1336 = vrot.slane %v1316, 2
  %v1337 = vsel %vm451, %v1331, %v1336
  %v1338 = vrot.slane %v1317, 2
  %v1339 = vsel %vm451, %v1334, %v1338
  %v1340 = vrot.slane %v1318, 2
  %v1341 = vrot.slane %v1001, 2
  %v1342 = vsel %vm451, %v1340, %v1341
  %v1343 = vrot.slane %v1319, 2
  %v1344 = vrot.slane %v1002, 2
  %v1345 = vsel %vm451, %v1343, %v1344
  %v1346 = vrot.slane %v1320, 2
  %v1347 = vsel %vm451, %v1341, %v1346
  %v1348 = vrot.slane %v1321, 2
  %v1349 = vsel %vm451, %v1344, %v1348
  %v1358 = vpack.c.bf16 %v1337, %v1332
  %v1359 = vpack.c.bf16 %v1339, %v1335
  %v1360 = vpack.c.bf16 %v1347, %v1342
  %v1361 = vpack.c.bf16 %v1349, %v1345
  %s1362 = scalar_lea.vmem %s2, 144
  %v1363 = vld [vmem:[%s1362] sm:$0xf]
  %v1364 = vld [vmem:[%s1362 + $0x4] sm:$0xf]
  %v1365 = vld [vmem:[%s1362 + $0x8] sm:$0xf]
  %v1366 = vld [vmem:[%s1362 + $0xc] sm:$0xf]
  %v1367 = vld [vmem:[%s1362 + $0x10] sm:$0xf]
  %v1368 = vld [vmem:[%s1362 + $0x14] sm:$0xf]
  %v1369 = vld [vmem:[%s1362 + $0x18] sm:$0xf]
  %v1370 = vld [vmem:[%s1362 + $0x1c] sm:$0xf]
  %v1371 = vld [vmem:[%s1362 + $0x20] sm:$0xf]
  %v1372 = vld [vmem:[%s1362 + $0x24] sm:$0xf]
  %v1373 = vld [vmem:[%s1362 + $0x28] sm:$0xf]
  %v1374 = vld [vmem:[%s1362 + $0x2c] sm:$0xf]
  %v1375 = vld [vmem:[%s1362 + $0x30] sm:$0xf]
  %v1376 = vld [vmem:[%s1362 + $0x34] sm:$0xf]
  %v1377 = vld [vmem:[%s1362 + $0x38] sm:$0xf]
  %v1378 = vld [vmem:[%s1362 + $0x3c] sm:$0xf]
  %v1379 = vld [vmem:[%s1362 + $0x40] sm:$0xf]
  %v1380 = vld [vmem:[%s1362 + $0x44] sm:$0xf]
  %v1399 = vunpack.c.l.b16 %v1363
  %v1400 = vunpack.c.l.b16 %v1364
  %v1401 = vunpack.c.l.b16 %v1365
  %v1402 = vunpack.c.l.b16 %v1366
  %v1403 = vunpack.c.l.b16 %v1367
  %v1404 = vunpack.c.l.b16 %v1368
  %v1405 = vunpack.c.l.b16 %v1369
  %v1406 = vunpack.c.l.b16 %v1370
  %v1407 = vunpack.c.l.b16 %v1371
  %v1408 = vunpack.c.l.b16 %v1372
  %v1409 = vunpack.c.l.b16 %v1373
  %v1410 = vunpack.c.l.b16 %v1374
  %v1411 = vunpack.c.l.b16 %v1375
  %v1412 = vunpack.c.l.b16 %v1376
  %v1413 = vunpack.c.l.b16 %v1377
  %v1414 = vunpack.c.l.b16 %v1378
  %v1415 = vunpack.c.l.b16 %v1379
  %v1416 = vunpack.c.l.b16 %v1380
  %v1417 = vpack.c.b16 %v1400, %v1399
  %v1418 = vpack.c.b16 %v1402, %v1401
  %v1419 = vpack.c.b16 %v1404, %v1403
  %v1420 = vpack.c.b16 %v1406, %v1405
  %v1421 = vpack.c.b16 %v1408, %v1407
  %v1422 = vpack.c.b16 %v1410, %v1409
  %v1423 = vpack.c.b16 %v1412, %v1411
  %v1424 = vpack.c.b16 %v1414, %v1413
  %v1425 = vpack.c.b16 %v1416, %v1415
  %v1436 = vsel %vm34, %v1359, 0
  %v1439 = vsel %vm34, %v1361, 0
  %1441 = vmatprep.subr.bf16.mxu0 0
  %1442 = vmatpush1.bf16.msra.mxu0 %v1417
  %1443 = vmatprep.subr.bf16.mxu0 0
  %1444 = vmatpush1.bf16.msra.mxu0 %v1418
  %1445 = vmatprep.subr.bf16.mxu0 0
  %1446 = vmatpush1.bf16.msra.mxu0 %v1419
  %1447 = vmatprep.subr.bf16.mxu0 0
  %1448 = vmatpush1.bf16.msra.mxu0 %v1420
  %1449 = vmatprep.subr.bf16.mxu0 0
  %1450 = vmatpush1.bf16.msra.mxu0 %v1421
  %1451 = vmatprep.subr.bf16.mxu0 0
  %1452 = vmatpush1.bf16.msra.mxu0 %v1422
  %1453 = vmatprep.subr.bf16.mxu0 0
  %1454 = vmatpush1.bf16.msra.mxu0 %v1423
  %1455 = vmatprep.subr.bf16.mxu0 0
  %1456 = vmatpush1.bf16.msra.mxu0 %v1424
  %1457 = vmatprep.subr.bf16.mxu0 0
  %1458 = vmatpush1.bf16.msra.mxu0 %v1425
  %1459 = vmatprep.subr.bf16.mxu0 0
  %1460 = vmatpush1.bf16.msra.mxu0 0
  %1461 = vmatprep.subr.bf16.mxu0 0
  %1462 = vmatpush1.bf16.msra.mxu0 0
  %1463 = vmatprep.subr.bf16.mxu0 0
  %1464 = vmatpush1.bf16.msra.mxu0 0
  %1465 = vmatprep.subr.bf16.mxu0 0
  %1466 = vmatpush1.bf16.msra.mxu0 0
  %1467 = vmatprep.subr.bf16.mxu0 0
  %1468 = vmatpush1.bf16.msra.mxu0 0
  %1469 = vmatprep.subr.bf16.mxu0 0
  %1470 = vmatpush1.bf16.msra.mxu0 0
  %1471 = vmatprep.subr.bf16.mxu0 0
  %1472 = vmatpush1.bf16.msra.mxu0 0
  %1473 = vmatprep.mubr.bf16.mxu0 %v1436
  %1474 = vmatmul.mubr.bf16.gmra.mrb[0].mxu0 %v1358
  %v1475 = vpop.f32.mrb[0].mxu0
  %v1476 = vadd.f32 0.0, %v1475
  %v1477 = vpop.f32.mrb[0].mxu0
  %v1478 = vpop.f32.mrb[0].mxu0
  %v1479 = vadd.f32 0.0, %v1478
  %v1480 = vpop.f32.mrb[0].mxu0
  %1481 = vmatprep.mubr.bf16.mxu0 %v1439
  %1482 = vmatmul.mubr.bf16.gmra.mrb[0].mxu0 %v1360
  %v1483 = vpop.f32.mrb[0].mxu0
  %v1484 = vadd.f32 0.0, %v1483
  %v1485 = vpop.f32.mrb[0].mxu0
  %v1486 = vpop.f32.mrb[0].mxu0
  %v1487 = vadd.f32 0.0, %v1486
  %v1488 = vpop.f32.mrb[0].mxu0
  %1489 = vdwg.mxu0
  %v1490 = vadd.f32 %v1300, %v1476
  %v1491 = vadd.f32 %v1303, %v1479
  %v1492 = vadd.f32 %v1308, %v1484
  %v1493 = vadd.f32 %v1311, %v1487
  %v1494 = vadd.f32 %v1490, %v1491
  %v1495 = vadd.f32 %v1494, %v1492
  %v1496 = vadd.f32 %v1495, %v1493
  %v1497 = vrot.slane %v1496, 4
  %v1498 = vadd.f32 %v1496, %v1497
  %v1499 = vrot.slane %v1498, 2
  %v1500 = vadd.f32 %v1498, %v1499
  %v1501 = vrot.slane %v1500, 1
  %v1502 = vadd.f32 %v1500, %v1501
  %v1503 = vmul.f32 %v1490, %v1490
  %v1504 = vmul.f32 %v1491, %v1491
  %v1505 = vmul.f32 %v1492, %v1492
  %v1506 = vmul.f32 %v1493, %v1493
  %v1507 = vadd.f32 %v1503, %v1504
  %v1508 = vadd.f32 %v1507, %v1505
  %v1509 = vadd.f32 %v1508, %v1506
  %v1510 = vrot.slane %v1509, 4
  %v1511 = vadd.f32 %v1509, %v1510
  %v1512 = vrot.slane %v1511, 2
  %v1513 = vadd.f32 %v1511, %v1512
  %v1514 = vrot.slane %v1513, 1
  %v1515 = vadd.f32 %v1513, %v1514
  %1516 = vmatprep.subr.mxu0 0.0
  %1517 = vmatpush1.msra.mxu0 %v47
  %1518 = vmatprep.subr.mxu0 0.0
  %1519 = vmatpush1.msra.mxu0 %v48
  %1520 = vmatprep.subr.mxu0 0.0
  %1521 = vmatpush1.msra.mxu0 %v49
  %1522 = vmatprep.subr.mxu0 0.0
  %1523 = vmatpush1.msra.mxu0 %v50
  %1524 = vmatprep.subr.mxu0 0.0
  %1525 = vmatpush1.msra.mxu0 %v51
  %1526 = vmatprep.subr.mxu0 0.0
  %1527 = vmatpush1.msra.mxu0 %v52
  %1528 = vmatprep.subr.mxu0 0.0
  %1529 = vmatpush1.msra.mxu0 %v53
  %1530 = vmatprep.subr.mxu0 0.0
  %1531 = vmatpush1.msra.mxu0 %v54
  %1532 = vmatprep.subr.mxu0 0.0
  %1533 = vmatpush1.msra.mxu0 %v55
  %1534 = vmatprep.subr.mxu0 0.0
  %1535 = vmatpush1.msra.mxu0 %v56
  %1536 = vmatprep.subr.mxu0 0.0
  %1537 = vmatpush1.msra.mxu0 %v57
  %1538 = vmatprep.subr.mxu0 0.0
  %1539 = vmatpush1.msra.mxu0 %v58
  %1540 = vmatprep.subr.mxu0 0.0
  %1541 = vmatpush1.msra.mxu0 %v59
  %1542 = vmatprep.subr.mxu0 0.0
  %1543 = vmatpush1.msra.mxu0 %v60
  %1544 = vmatprep.subr.mxu0 0.0
  %1545 = vmatpush1.msra.mxu0 %v61
  %1546 = vmatprep.subr.mxu0 0.0
  %1547 = vmatpush1.msra.mxu0 %v62
  %1548 = vmatprep.subr.mxu0 0.0
  %1549 = vmatpush1.msra.mxu0 0.0
  %1550 = vmatprep.subr.mxu0 0.0
  %1551 = vmatpush1.msra.mxu0 0.0
  %1552 = vmatprep.subr.mxu0 0.0
  %1553 = vmatpush1.msra.mxu0 0.0
  %1554 = vmatprep.subr.mxu0 0.0
  %1555 = vmatpush1.msra.mxu0 0.0
  %1556 = vmatprep.subr.mxu0 0.0
  %1557 = vmatpush1.msra.mxu0 0.0
  %1558 = vmatprep.subr.mxu0 0.0
  %1559 = vmatpush1.msra.mxu0 0.0
  %1560 = vmatprep.subr.mxu0 0.0
  %1561 = vmatpush1.msra.mxu0 0.0
  %1562 = vmatprep.subr.mxu0 0.0
  %1563 = vmatpush1.msra.mxu0 0.0
  %1564 = vmatprep.subr.mxu0 0.0
  %1565 = vmatpush1.msra.mxu0 0.0
  %1566 = vmatprep.subr.mxu0 0.0
  %1567 = vmatpush1.msra.mxu0 0.0
  %1568 = vmatprep.subr.mxu0 0.0
  %1569 = vmatpush1.msra.mxu0 0.0
  %1570 = vmatprep.subr.mxu0 0.0
  %1571 = vmatpush1.msra.mxu0 0.0
  %1572 = vmatprep.subr.mxu0 0.0
  %1573 = vmatpush1.msra.mxu0 0.0
  %1574 = vmatprep.subr.mxu0 0.0
  %1575 = vmatpush1.msra.mxu0 0.0
  %1576 = vmatprep.subr.mxu0 0.0
  %1577 = vmatpush1.msra.mxu0 0.0
  %1578 = vmatprep.subr.mxu0 0.0
  %1579 = vmatpush1.msra.mxu0 0.0
  %1580 = vmatprep.mubr.f32.mxu0 0.0
  %1581 = vmatmul.mubr.f32.gmra.mrb[0].mxu0 %v1502
  %v1582 = vpop.f32.mrb[0].mxu0
  %v1583 = vadd.f32 0.0, %v1582
  %v1584 = vpop.f32.mrb[0].mxu0
  %1585 = vdwg.mxu0
  %1586 = vmatprep.subr.mxu0 0.0
  %1587 = vmatpush1.msra.mxu0 %v47
  %1588 = vmatprep.subr.mxu0 0.0
  %1589 = vmatpush1.msra.mxu0 %v48
  %1590 = vmatprep.subr.mxu0 0.0
  %1591 = vmatpush1.msra.mxu0 %v49
  %1592 = vmatprep.subr.mxu0 0.0
  %1593 = vmatpush1.msra.mxu0 %v50
  %1594 = vmatprep.subr.mxu0 0.0
  %1595 = vmatpush1.msra.mxu0 %v51
  %1596 = vmatprep.subr.mxu0 0.0
  %1597 = vmatpush1.msra.mxu0 %v52
  %1598 = vmatprep.subr.mxu0 0.0
  %1599 = vmatpush1.msra.mxu0 %v53
  %1600 = vmatprep.subr.mxu0 0.0
  %1601 = vmatpush1.msra.mxu0 %v54
  %1602 = vmatprep.subr.mxu0 0.0
  %1603 = vmatpush1.msra.mxu0 %v55
  %1604 = vmatprep.subr.mxu0 0.0
  %1605 = vmatpush1.msra.mxu0 %v56
  %1606 = vmatprep.subr.mxu0 0.0
  %1607 = vmatpush1.msra.mxu0 %v57
  %1608 = vmatprep.subr.mxu0 0.0
  %1609 = vmatpush1.msra.mxu0 %v58
  %1610 = vmatprep.subr.mxu0 0.0
  %1611 = vmatpush1.msra.mxu0 %v59
  %1612 = vmatprep.subr.mxu0 0.0
  %1613 = vmatpush1.msra.mxu0 %v60
  %1614 = vmatprep.subr.mxu0 0.0
  %1615 = vmatpush1.msra.mxu0 %v61
  %1616 = vmatprep.subr.mxu0 0.0
  %1617 = vmatpush1.msra.mxu0 %v62
  %1618 = vmatprep.subr.mxu0 0.0
  %1619 = vmatpush1.msra.mxu0 0.0
  %1620 = vmatprep.subr.mxu0 0.0
  %1621 = vmatpush1.msra.mxu0 0.0
  %1622 = vmatprep.subr.mxu0 0.0
  %1623 = vmatpush1.msra.mxu0 0.0
  %1624 = vmatprep.subr.mxu0 0.0
  %1625 = vmatpush1.msra.mxu0 0.0
  %1626 = vmatprep.subr.mxu0 0.0
  %1627 = vmatpush1.msra.mxu0 0.0
  %1628 = vmatprep.subr.mxu0 0.0
  %1629 = vmatpush1.msra.mxu0 0.0
  %1630 = vmatprep.subr.mxu0 0.0
  %1631 = vmatpush1.msra.mxu0 0.0
  %1632 = vmatprep.subr.mxu0 0.0
  %1633 = vmatpush1.msra.mxu0 0.0
  %1634 = vmatprep.subr.mxu0 0.0
  %1635 = vmatpush1.msra.mxu0 0.0
  %1636 = vmatprep.subr.mxu0 0.0
  %1637 = vmatpush1.msra.mxu0 0.0
  %1638 = vmatprep.subr.mxu0 0.0
  %1639 = vmatpush1.msra.mxu0 0.0
  %1640 = vmatprep.subr.mxu0 0.0
  %1641 = vmatpush1.msra.mxu0 0.0
  %1642 = vmatprep.subr.mxu0 0.0
  %1643 = vmatpush1.msra.mxu0 0.0
  %1644 = vmatprep.subr.mxu0 0.0
  %1645 = vmatpush1.msra.mxu0 0.0
  %1646 = vmatprep.subr.mxu0 0.0
  %1647 = vmatpush1.msra.mxu0 0.0
  %1648 = vmatprep.subr.mxu0 0.0
  %1649 = vmatpush1.msra.mxu0 0.0
  %1650 = vmatprep.mubr.f32.mxu0 0.0
  %1651 = vmatmul.mubr.f32.gmra.mrb[0].mxu0 %v1515
  %v1652 = vpop.f32.mrb[0].mxu0
  %v1653 = vadd.f32 0.0, %v1652
  %v1654 = vpop.f32.mrb[0].mxu0
  %1655 = vdwg.mxu0
  %v1656 = vmul.f32 %v1583, 0.001953125
  %v1657 = vmul.f32 %v1653, 0.001953125
  %v1658 = vmul.f32 %v1656, %v1656
  %v1659 = vsub.f32 %v1657, %v1658
  %v1660 = vld [vmem:[%s5] sm:$0x1]
  %v1661 = vadd.f32 %v1659, 1e-05
  %v1662 = vrsqrt.pop %v1661
  %v1663 = vmul.f32 %v1660, %v1662
  %v1664 = vld [vmem:[%s6] sm:$0x1]
  %v1665 = vmul.f32 %v1656, %v1663
  %v1666 = vsub.f32 %v1664, %v1665
  %v1668 = vsel %vm103, %v1663, 0
  %1670 = vmatprep.subr.mxu0 0.0
  %1671 = vmatpush1.msra.mxu0 %v63
  %1672 = vmatprep.subr.mxu0 0.0
  %1673 = vmatpush1.msra.mxu0 0.0
  %1674 = vmatprep.subr.mxu0 0.0
  %1675 = vmatpush1.msra.mxu0 0.0
  %1676 = vmatprep.subr.mxu0 0.0
  %1677 = vmatpush1.msra.mxu0 0.0
  %1678 = vmatprep.subr.mxu0 0.0
  %1679 = vmatpush1.msra.mxu0 0.0
  %1680 = vmatprep.subr.mxu0 0.0
  %1681 = vmatpush1.msra.mxu0 0.0
  %1682 = vmatprep.subr.mxu0 0.0
  %1683 = vmatpush1.msra.mxu0 0.0
  %1684 = vmatprep.subr.mxu0 0.0
  %1685 = vmatpush1.msra.mxu0 0.0
  %1686 = vmatprep.subr.mxu0 0.0
  %1687 = vmatpush1.msra.mxu0 0.0
  %1688 = vmatprep.subr.mxu0 0.0
  %1689 = vmatpush1.msra.mxu0 0.0
  %1690 = vmatprep.subr.mxu0 0.0
  %1691 = vmatpush1.msra.mxu0 0.0
  %1692 = vmatprep.subr.mxu0 0.0
  %1693 = vmatpush1.msra.mxu0 0.0
  %1694 = vmatprep.subr.mxu0 0.0
  %1695 = vmatpush1.msra.mxu0 0.0
  %1696 = vmatprep.subr.mxu0 0.0
  %1697 = vmatpush1.msra.mxu0 0.0
  %1698 = vmatprep.subr.mxu0 0.0
  %1699 = vmatpush1.msra.mxu0 0.0
  %1700 = vmatprep.subr.mxu0 0.0
  %1701 = vmatpush1.msra.mxu0 0.0
  %1702 = vmatprep.subr.mxu0 0.0
  %1703 = vmatpush1.msra.mxu0 0.0
  %1704 = vmatprep.subr.mxu0 0.0
  %1705 = vmatpush1.msra.mxu0 0.0
  %1706 = vmatprep.subr.mxu0 0.0
  %1707 = vmatpush1.msra.mxu0 0.0
  %1708 = vmatprep.subr.mxu0 0.0
  %1709 = vmatpush1.msra.mxu0 0.0
  %1710 = vmatprep.subr.mxu0 0.0
  %1711 = vmatpush1.msra.mxu0 0.0
  %1712 = vmatprep.subr.mxu0 0.0
  %1713 = vmatpush1.msra.mxu0 0.0
  %1714 = vmatprep.subr.mxu0 0.0
  %1715 = vmatpush1.msra.mxu0 0.0
  %1716 = vmatprep.subr.mxu0 0.0
  %1717 = vmatpush1.msra.mxu0 0.0
  %1718 = vmatprep.subr.mxu0 0.0
  %1719 = vmatpush1.msra.mxu0 0.0
  %1720 = vmatprep.subr.mxu0 0.0
  %1721 = vmatpush1.msra.mxu0 0.0
  %1722 = vmatprep.subr.mxu0 0.0
  %1723 = vmatpush1.msra.mxu0 0.0
  %1724 = vmatprep.subr.mxu0 0.0
  %1725 = vmatpush1.msra.mxu0 0.0
  %1726 = vmatprep.subr.mxu0 0.0
  %1727 = vmatpush1.msra.mxu0 0.0
  %1728 = vmatprep.subr.mxu0 0.0
  %1729 = vmatpush1.msra.mxu0 0.0
  %1730 = vmatprep.subr.mxu0 0.0
  %1731 = vmatpush1.msra.mxu0 0.0
  %1732 = vmatprep.subr.mxu0 0.0
  %1733 = vmatpush1.msra.mxu0 0.0
  %1734 = vmatprep.mubr.f32.mxu0 0.0
  %1735 = vmatmul.mubr.f32.gmra.mrb[0].mxu0 %v1668
  %v1736 = vpop.f32.mrb[0].mxu0
  %v1737 = vadd.f32 0.0, %v1736
  %v1738 = vpop.f32.mrb[0].mxu0
  %1739 = vdwg.mxu0
  %v1741 = vsel %vm103, %v1666, 0
  %1743 = vmatprep.subr.mxu0 0.0
  %1744 = vmatpush1.msra.mxu0 %v63
  %1745 = vmatprep.subr.mxu0 0.0
  %1746 = vmatpush1.msra.mxu0 0.0
  %1747 = vmatprep.subr.mxu0 0.0
  %1748 = vmatpush1.msra.mxu0 0.0
  %1749 = vmatprep.subr.mxu0 0.0
  %1750 = vmatpush1.msra.mxu0 0.0
  %1751 = vmatprep.subr.mxu0 0.0
  %1752 = vmatpush1.msra.mxu0 0.0
  %1753 = vmatprep.subr.mxu0 0.0
  %1754 = vmatpush1.msra.mxu0 0.0
  %1755 = vmatprep.subr.mxu0 0.0
  %1756 = vmatpush1.msra.mxu0 0.0
  %1757 = vmatprep.subr.mxu0 0.0
  %1758 = vmatpush1.msra.mxu0 0.0
  %1759 = vmatprep.subr.mxu0 0.0
  %1760 = vmatpush1.msra.mxu0 0.0
  %1761 = vmatprep.subr.mxu0 0.0
  %1762 = vmatpush1.msra.mxu0 0.0
  %1763 = vmatprep.subr.mxu0 0.0
  %1764 = vmatpush1.msra.mxu0 0.0
  %1765 = vmatprep.subr.mxu0 0.0
  %1766 = vmatpush1.msra.mxu0 0.0
  %1767 = vmatprep.subr.mxu0 0.0
  %1768 = vmatpush1.msra.mxu0 0.0
  %1769 = vmatprep.subr.mxu0 0.0
  %1770 = vmatpush1.msra.mxu0 0.0
  %1771 = vmatprep.subr.mxu0 0.0
  %1772 = vmatpush1.msra.mxu0 0.0
  %1773 = vmatprep.subr.mxu0 0.0
  %1774 = vmatpush1.msra.mxu0 0.0
  %1775 = vmatprep.subr.mxu0 0.0
  %1776 = vmatpush1.msra.mxu0 0.0
  %1777 = vmatprep.subr.mxu0 0.0
  %1778 = vmatpush1.msra.mxu0 0.0
  %1779 = vmatprep.subr.mxu0 0.0
  %1780 = vmatpush1.msra.mxu0 0.0
  %1781 = vmatprep.subr.mxu0 0.0
  %1782 = vmatpush1.msra.mxu0 0.0
  %1783 = vmatprep.subr.mxu0 0.0
  %1784 = vmatpush1.msra.mxu0 0.0
  %1785 = vmatprep.subr.mxu0 0.0
  %1786 = vmatpush1.msra.mxu0 0.0
  %1787 = vmatprep.subr.mxu0 0.0
  %1788 = vmatpush1.msra.mxu0 0.0
  %1789 = vmatprep.subr.mxu0 0.0
  %1790 = vmatpush1.msra.mxu0 0.0
  %1791 = vmatprep.subr.mxu0 0.0
  %1792 = vmatpush1.msra.mxu0 0.0
  %1793 = vmatprep.subr.mxu0 0.0
  %1794 = vmatpush1.msra.mxu0 0.0
  %1795 = vmatprep.subr.mxu0 0.0
  %1796 = vmatpush1.msra.mxu0 0.0
  %1797 = vmatprep.subr.mxu0 0.0
  %1798 = vmatpush1.msra.mxu0 0.0
  %1799 = vmatprep.subr.mxu0 0.0
  %1800 = vmatpush1.msra.mxu0 0.0
  %1801 = vmatprep.subr.mxu0 0.0
  %1802 = vmatpush1.msra.mxu0 0.0
  %1803 = vmatprep.subr.mxu0 0.0
  %1804 = vmatpush1.msra.mxu0 0.0
  %1805 = vmatprep.subr.mxu0 0.0
  %1806 = vmatpush1.msra.mxu0 0.0
  %1807 = vmatprep.mubr.f32.mxu0 0.0
  %1808 = vmatmul.mubr.f32.gmra.mrb[0].mxu0 %v1741
  %v1809 = vpop.f32.mrb[0].mxu0
  %v1810 = vadd.f32 0.0, %v1809
  %v1811 = vpop.f32.mrb[0].mxu0
  %1812 = vdwg.mxu0
  %v1813 = vlaneseq
  %v1814 = vshrl.u32 %v1813, 7
  %v1815 = vsub.s32 0, %v1814
  %v1816 = vrot.slane %v1737, %v1815
  %v1817 = vmul.f32 %v1490, %v1816
  %v1818 = vmul.f32 %v1491, %v1816
  %v1819 = vmul.f32 %v1492, %v1816
  %v1820 = vmul.f32 %v1493, %v1816
  %v1821 = vlaneseq
  %v1822 = vshrl.u32 %v1821, 7
  %v1823 = vsub.s32 0, %v1822
  %v1824 = vrot.slane %v1810, %v1823
  %v1825 = vadd.f32 %v1817, %v1824
  %v1826 = vadd.f32 %v1818, %v1824
  %v1827 = vadd.f32 %v1819, %v1824
  %v1828 = vadd.f32 %v1820, %v1824
  %v1829 = vadd.f32 %v1825, %v64
  %v1830 = vadd.f32 %v1826, %v65
  %v1831 = vadd.f32 %v1827, %v66
  %v1832 = vadd.f32 %v1828, %v67
  %v1833 = vmax.f32 %v1829, 0.0
  %v1834 = vmax.f32 %v1830, 0.0
  %v1835 = vmax.f32 %v1831, 0.0
  %v1836 = vmax.f32 %v1832, 0.0
  %1837 = vst [vmem:[%s9] sm:$0xff] %v1833
  %1838 = vst [vmem:[%s9 + $0x8] sm:$0xff] %v1834
  %1839 = vst [vmem:[%s9 + $0x10] sm:$0xff] %v1835
  %1840 = vst [vmem:[%s9 + $0x18] sm:$0xff] %v1836
  // Predicated region
  $region38: #{resnet_block.1} parent=0 // pred_check
    _
  $region39: #{resnet_block.1} parent=0 // pred_check_branch
    %1842 = sbr.rel (0) target = $region41
  $region40: #{resnet_block.1} parent=0 // pred_region
    _
  $region41: #{resnet_block.1} parent=0 // pred_fallthru
    _
  // Predicated region
  $region42: #{resnet_block.1} parent=0 // pred_check
    _
  $region43: #{resnet_block.1} parent=0 // pred_check_branch
    %1844 = sbr.rel (0) target = $region45
  $region44: #{resnet_block.1} parent=0 // pred_region
    _
  $region45: #{resnet_block.1} parent=0 // pred_fallthru
    _

</llo_original>
